<compile_context>
chip_gen: v7x
topology: tpu7x:2x2x1
jax: 0.10.0
libtpu: 0.0.40
codegen_flags: <defaults>
</compile_context>

<pallas_src>
import functools

import numpy as np

import jax
import jax.numpy as jnp
from jax.experimental import pallas as pl
from jax.experimental.pallas import tpu as pltpu

# ----------------------- config (net_config + syntax) -----------------------
NUM_POINTS = 8                      # net_config['num_points']
DIMS = [16, 32, 32]                 # net_config['dims']  (MLP hidden dims)
OUT_DIM = 3 * NUM_POINTS            # last MLP layer size (doLastRelu=False)

SYNTAX_CW = {                       # codeword row layout (syntax_cw)
    'cw': (0, 15),
    'block_center': (16, 18),
    'block_scale': 19,
    'pc_start': 20,
    '__len__': 21,
}
SYNTAX_REC = {                      # reconstruction row layout (syntax_rec)
    'xyz': (0, 2),
    'block_start': 3,
    'block_center': (4, 6),
    'block_scale': 7,
    'pc_start': 8,
    '__len__': 9,
}
CW_LEN = SYNTAX_CW['__len__']
REC_LEN = SYNTAX_REC['__len__']
REC72 = NUM_POINTS * REC_LEN        # 72: one assembled record group per codeword

CW_LO, CW_HI = SYNTAX_CW['cw']
C_LO, C_HI = SYNTAX_CW['block_center']
S_IDX = SYNTAX_CW['block_scale']
P_IDX = SYNTAX_CW['pc_start']
R_XYZ_LO, R_XYZ_HI = SYNTAX_REC['xyz']
R_BS = SYNTAX_REC['block_start']
R_C_LO, R_C_HI = SYNTAX_REC['block_center']
R_SC = SYNTAX_REC['block_scale']
R_PS = SYNTAX_REC['pc_start']

# Output lanes that hold xyz (lane 9*p + c for point p, coord c).
XYZ_COLS = np.asarray([p * REC_LEN + R_XYZ_LO + c
                       for p in range(NUM_POINTS) for c in range(3)], np.int32)

# The pass-through selector matmul reads a 16-wide window of cw (columns
# TPL_LO .. CW_LEN-1) so the contraction dim stays MXU-aligned (K=16).
TPL_K = 16
TPL_LO = CW_LEN - TPL_K             # = 5; covers center(16..18), scale(19), pc_start(20)
assert TPL_LO <= C_LO


def _build_record_consts():
    """Constant selector T (TPL_K, 72) and bias row t0 (1, 72).

    template = cw[:, TPL_LO:] @ T + t0 yields, for every point p of a row:
      lanes 9p+0..2 : block_center   (the "+ center" term of xyz)
      lane  9p+3    : block_start    (1.0 for p == 0, via t0)
      lanes 9p+4..6 : block_center   (copied field)
      lane  9p+7    : block_scale    (copied field)
      lane  9p+8    : pc_start       (copied field, p == 0 only)
    """
    T = np.zeros((TPL_K, REC72), np.float32)
    t0 = np.zeros((1, REC72), np.float32)
    for p in range(NUM_POINTS):
        r = p * REC_LEN
        for c in range(3):
            T[C_LO + c - TPL_LO, r + R_XYZ_LO + c] = 1.0   # "+ center" on xyz
            T[C_LO + c - TPL_LO, r + R_C_LO + c] = 1.0     # center copy
        T[S_IDX - TPL_LO, r + R_SC] = 1.0                  # scale copy
    T[P_IDX - TPL_LO, R_PS] = 1.0                          # pc_start, first point only
    t0[0, R_BS] = 1.0                                      # block_start, first point only
    return T, t0


_T_NP, _T0_NP = _build_record_consts()


# ------------------------------- Pallas kernel ------------------------------
def mlp_decoder_kernel(cw_ref, w1_ref, b1_ref, w2_ref, b2_ref, w3_ref, b3_ref,
                       t_ref, t0_ref, out_ref):
    """One batch tile, native layouts: cw_ref (tb, 21) f32 -> out_ref (tb, 72) f32.

    The 3-layer pointwise MLP runs batch-major on the MXU (bf16 operands,
    f32 accumulation).  The last layer's weight is pre-scattered to the
    72-lane record layout (exact zeros on non-xyz lanes) and the pass-through
    record fields are produced by a constant 0/1 selector matmul, so the whole
    record slab is assembled without lane shuffles and written with one dense
    store.
    """
    cw = cw_ref[...]                                           # (tb, 21) f32

    # ---- pointwise MLP (bf16 operands, f32 accumulation) --------------------
    x = cw[:, CW_LO:CW_HI + 1].astype(jnp.bfloat16)            # (tb, 16)
    h = jnp.dot(x, w1_ref[...], preferred_element_type=jnp.float32)
    h = jnp.maximum(h + b1_ref[...], 0.0)                      # ReLU
    h = jnp.dot(h.astype(jnp.bfloat16), w2_ref[...],
                preferred_element_type=jnp.float32)
    h = jnp.maximum(h + b2_ref[...], 0.0)                      # ReLU
    # Last layer, no ReLU (doLastRelu=False).  Weight columns live at lanes
    # 9p+{0,1,2}; all other lanes of pc are exactly zero.
    pc = jnp.dot(h.astype(jnp.bfloat16), w3_ref[...],
                 preferred_element_type=jnp.float32) + b3_ref[...]   # (tb, 72)

    # ---- pass-through fields via constant selector matmul -------------------
    # hi/lo bf16 split keeps the copied center/scale/pc_start values accurate
    # to ~2^-16 relative while staying on the (idle) MXU.
    a = cw[:, TPL_LO:CW_LEN]                                   # (tb, 16)
    a_hi = a.astype(jnp.bfloat16)
    a_lo = (a - a_hi.astype(jnp.float32)).astype(jnp.bfloat16)
    tmpl = (jnp.dot(a_hi, t_ref[...], preferred_element_type=jnp.float32) +
            jnp.dot(a_lo, t_ref[...], preferred_element_type=jnp.float32))

    # ---- normalize & assemble ------------------------------------------------
    scale = cw[:, S_IDX:S_IDX + 1]                             # (tb, 1)
    scale = jnp.where(scale == 0.0, 1.0, scale)                # guard ragged-tail rows
    inv = pl.reciprocal(scale, approx=False)                   # exact; EUP path
    # xyz lanes: pc/scale + center; all other lanes: pc == 0, so only the
    # template / block_start constant survive.  Single dense store.
    out_ref[...] = pc * inv + tmpl + t0_ref[...]


# --------------------------------- wrapper -----------------------------------
def _round_up(x, m):
    return ((x + m - 1) // m) * m


@functools.partial(jax.jit, static_argnames=("tb",))
def mlp_decoder_hetero(cw, params, *, tb=4096):
    """Full MlpDecoderHetero.forward; returns (B*NUM_POINTS, REC_LEN) float32."""
    B = cw.shape[0]
    w1, b1, w2, b2, w3, b3 = params

    cw32 = cw.astype(jnp.float32)                              # no transpose, no pad

    # MXU operands in bf16 (tiny, one-time); biases stay f32 (post-accumulation).
    w1b = w1.astype(jnp.bfloat16)
    w2b = w2.astype(jnp.bfloat16)
    b1r = b1.reshape(1, -1).astype(jnp.float32)
    b2r = b2.reshape(1, -1).astype(jnp.float32)
    # Last-layer weight/bias scattered to the 72-lane record layout.
    w3e = (jnp.zeros((w3.shape[0], REC72), jnp.float32)
           .at[:, XYZ_COLS].set(w3.astype(jnp.float32))
           .astype(jnp.bfloat16))
    b3e = (jnp.zeros((1, REC72), jnp.float32)
           .at[:, XYZ_COLS].set(b3.reshape(1, -1).astype(jnp.float32)))
    t_sel = jnp.asarray(_T_NP, jnp.bfloat16)                   # exact 0/1 entries
    t0 = jnp.asarray(_T0_NP, jnp.float32)

    # Batch tile on the sublane (row) axis: multiple of 8 is enough; the last
    # block may be ragged (no padding copy).  Split larger batches into >= 2
    # "parallel" grid steps so v7x's two TensorCores both get work.
    tb = max(8, _round_up(int(tb), 8))
    if B >= 1024:
        tb = min(tb, _round_up(pl.cdiv(B, 2), 8))
    tb = min(tb, _round_up(B, 8))
    grid = (pl.cdiv(B, tb),)

    out72 = pl.pallas_call(
        mlp_decoder_kernel,
        out_shape=jax.ShapeDtypeStruct((B, REC72), jnp.float32),
        grid_spec=pltpu.PrefetchScalarGridSpec(
            num_scalar_prefetch=0,
            grid=grid,
            in_specs=[
                pl.BlockSpec((tb, CW_LEN), lambda i: (i, 0)),  # codeword rows
                pl.BlockSpec(w1b.shape, lambda i: (0, 0)),     # weights: VMEM-resident
                pl.BlockSpec(b1r.shape, lambda i: (0, 0)),
                pl.BlockSpec(w2b.shape, lambda i: (0, 0)),
                pl.BlockSpec(b2r.shape, lambda i: (0, 0)),
                pl.BlockSpec(w3e.shape, lambda i: (0, 0)),
                pl.BlockSpec(b3e.shape, lambda i: (0, 0)),
                pl.BlockSpec(t_sel.shape, lambda i: (0, 0)),
                pl.BlockSpec(t0.shape, lambda i: (0, 0)),
            ],
            out_specs=pl.BlockSpec((tb, REC72), lambda i: (i, 0)),
        ),
        compiler_params=pltpu.CompilerParams(
            dimension_semantics=("parallel",),
            vmem_limit_bytes=48 * 1024 * 1024),
    )(cw32, w1b, b1r, w2b, b2r, w3e, b3e, t_sel, t0)

    # Free, contiguous view: (B, 72) -> (B*NUM_POINTS, REC_LEN).  No transpose.
    return out72.reshape(B * NUM_POINTS, REC_LEN)


# ------------------------------ pure-JAX reference --------------------------
def reference(cw, params):
    w1, b1, w2, b2, w3, b3 = params
    h = jnp.maximum(cw[:, CW_LO:CW_HI + 1] @ w1 + b1.reshape(1, -1), 0.0)
    h = jnp.maximum(h @ w2 + b2.reshape(1, -1), 0.0)
    pc = (h @ w3 + b3.reshape(1, -1)).reshape(-1, 3)
    B = cw.shape[0]
    N = B * NUM_POINTS
    center = jnp.repeat(cw[:, C_LO:C_HI + 1], NUM_POINTS, axis=0)
    scale = jnp.repeat(cw[:, S_IDX:S_IDX + 1], NUM_POINTS, axis=0)
    pc = pc / scale + center
    point_idx = jnp.arange(N) % NUM_POINTS
    block_start = (point_idx == 0).astype(jnp.float32)
    pc_start = jnp.where(point_idx == 0, jnp.repeat(cw[:, P_IDX], NUM_POINTS), 0.0)
    out = jnp.zeros((N, REC_LEN), jnp.float32)
    out = out.at[:, R_XYZ_LO:R_XYZ_HI + 1].set(pc)
    out = out.at[:, R_BS].set(block_start)
    out = out.at[:, R_C_LO:R_C_HI + 1].set(center)
    out = out.at[:, R_SC].set(scale[:, 0])
    out = out.at[:, R_PS].set(pc_start)
    return out


# ------------------------------------ main -----------------------------------
if __name__ == "__main__":
    key = jax.random.PRNGKey(0)
    kcw, k1, k2, k3, kb1, kb2, kb3 = jax.random.split(key, 7)

    # Deterministic synthetic PointwiseMLP parameters: Linear(16->32),
    # Linear(32->32), Linear(32->24); ReLU after all but the last.
    w1 = 0.1 * jax.random.normal(k1, (DIMS[0], DIMS[1]), jnp.float32)
    b1 = 0.01 * jax.random.normal(kb1, (1, DIMS[1]), jnp.float32)
    w2 = 0.1 * jax.random.normal(k2, (DIMS[1], DIMS[2]), jnp.float32)
    b2 = 0.01 * jax.random.normal(kb2, (1, DIMS[2]), jnp.float32)
    w3 = 0.1 * jax.random.normal(k3, (DIMS[2], OUT_DIM), jnp.float32)
    b3 = 0.01 * jax.random.normal(kb3, (1, OUT_DIM), jnp.float32)
    params = (w1, b1, w2, b2, w3, b3)

    # B=200: exact-fit single block.  B=203: ragged final block (B % 8 != 0).
    # B=2400: multi-step grid (resident weights + "parallel" axis exercised).
    for B in (200, 203, 2400):
        cw = jax.random.normal(jax.random.fold_in(kcw, B), (B, CW_LEN), jnp.float32)
        # block_scale must be strictly positive (it divides the points).
        cw = cw.at[:, S_IDX].set(jnp.abs(cw[:, S_IDX]) + 1.0)

        out = jax.block_until_ready(mlp_decoder_hetero(cw, params))
        ref = jax.block_until_ready(reference(cw, params))

        assert out.shape == (B * NUM_POINTS, REC_LEN)
        max_err = float(jnp.max(jnp.abs(out - ref)))
        assert max_err < 2e-2, f"mismatch vs reference (B={B}), max_err={max_err}"

    print("KERNEL_OK")
</pallas_src>

<mosaic_0001>
module attributes {stable_mosaic.version = 11 : i64} {
  func.func @mlp_decoder_kernel(%arg0: i32, %arg1: memref<200x21xf32, #tpu.memory_space<vmem>>, %arg2: memref<16x32xbf16, #tpu.memory_space<vmem>>, %arg3: memref<1x32xf32, #tpu.memory_space<vmem>>, %arg4: memref<32x32xbf16, #tpu.memory_space<vmem>>, %arg5: memref<1x32xf32, #tpu.memory_space<vmem>>, %arg6: memref<32x72xbf16, #tpu.memory_space<vmem>>, %arg7: memref<1x72xf32, #tpu.memory_space<vmem>>, %arg8: memref<16x72xbf16, #tpu.memory_space<vmem>>, %arg9: memref<1x72xf32, #tpu.memory_space<vmem>>, %arg10: memref<200x72xf32, #tpu.memory_space<vmem>>) attributes {dimension_semantics = [#tpu.dimension_semantics<parallel>], iteration_bounds = array<i64: 1>, scalar_prefetch = 0 : i64, scratch_operands = 0 : i64, tpu.core_type = #tpu.core_type<tc>, window_params = [{transform_indices = @transform_0, window_bounds = array<i64: 200, 21>}, {pipeline_mode = #tpu.pipeline_mode<synchronous>, transform_indices = @transform_1, window_bounds = array<i64: 16, 32>}, {pipeline_mode = #tpu.pipeline_mode<synchronous>, transform_indices = @transform_2, window_bounds = array<i64: 1, 32>}, {pipeline_mode = #tpu.pipeline_mode<synchronous>, transform_indices = @transform_3, window_bounds = array<i64: 32, 32>}, {pipeline_mode = #tpu.pipeline_mode<synchronous>, transform_indices = @transform_4, window_bounds = array<i64: 1, 32>}, {pipeline_mode = #tpu.pipeline_mode<synchronous>, transform_indices = @transform_5, window_bounds = array<i64: 32, 72>}, {pipeline_mode = #tpu.pipeline_mode<synchronous>, transform_indices = @transform_6, window_bounds = array<i64: 1, 72>}, {pipeline_mode = #tpu.pipeline_mode<synchronous>, transform_indices = @transform_7, window_bounds = array<i64: 16, 72>}, {pipeline_mode = #tpu.pipeline_mode<synchronous>, transform_indices = @transform_8, window_bounds = array<i64: 1, 72>}, {transform_indices = @transform_9, window_bounds = array<i64: 200, 72>}]} {
    %c0 = arith.constant 0 : index
    %c0_0 = arith.constant 0 : index
    %0 = vector.load %arg1[%c0, %c0_0] : memref<200x21xf32, #tpu.memory_space<vmem>>, vector<200x21xf32>
    %1 = vector.extract_strided_slice %0 {offsets = [0, 0], sizes = [200, 16], strides = [1, 1]} : vector<200x21xf32> to vector<200x16xf32>
    %2 = arith.truncf %1 : vector<200x16xf32> to vector<200x16xbf16>
    %c0_1 = arith.constant 0 : index
    %c0_2 = arith.constant 0 : index
    %3 = vector.load %arg2[%c0_1, %c0_2] : memref<16x32xbf16, #tpu.memory_space<vmem>>, vector<16x32xbf16>
    %cst = arith.constant dense<0.000000e+00> : vector<200x32xf32>
    %4 = tpu.matmul %2, %3, %cst {dimension_numbers = #tpu.dot_dimension_numbers<[1], [0], [0], [1], [0, 0, 1, 1], [], []>} : vector<200x16xbf16>, vector<16x32xbf16>, vector<200x32xf32> -> vector<200x32xf32>
    %c0_3 = arith.constant 0 : index
    %c0_4 = arith.constant 0 : index
    %5 = vector.load %arg3[%c0_3, %c0_4] : memref<1x32xf32, #tpu.memory_space<vmem>>, vector<1x32xf32>
    %6 = vector.broadcast %5 : vector<1x32xf32> to vector<200x32xf32>
    %7 = arith.addf %4, %6 : vector<200x32xf32>
    %cst_5 = arith.constant 0.000000e+00 : f32
    %8 = vector.broadcast %cst_5 : f32 to vector<200x32xf32>
    %9 = arith.maximumf %7, %8 : vector<200x32xf32>
    %10 = arith.truncf %9 : vector<200x32xf32> to vector<200x32xbf16>
    %c0_6 = arith.constant 0 : index
    %c0_7 = arith.constant 0 : index
    %11 = vector.load %arg4[%c0_6, %c0_7] : memref<32x32xbf16, #tpu.memory_space<vmem>>, vector<32x32xbf16>
    %cst_8 = arith.constant dense<0.000000e+00> : vector<200x32xf32>
    %12 = tpu.matmul %10, %11, %cst_8 {dimension_numbers = #tpu.dot_dimension_numbers<[1], [0], [0], [1], [0, 0, 1, 1], [], []>} : vector<200x32xbf16>, vector<32x32xbf16>, vector<200x32xf32> -> vector<200x32xf32>
    %c0_9 = arith.constant 0 : index
    %c0_10 = arith.constant 0 : index
    %13 = vector.load %arg5[%c0_9, %c0_10] : memref<1x32xf32, #tpu.memory_space<vmem>>, vector<1x32xf32>
    %14 = vector.broadcast %13 : vector<1x32xf32> to vector<200x32xf32>
    %15 = arith.addf %12, %14 : vector<200x32xf32>
    %cst_11 = arith.constant 0.000000e+00 : f32
    %16 = vector.broadcast %cst_11 : f32 to vector<200x32xf32>
    %17 = arith.maximumf %15, %16 : vector<200x32xf32>
    %18 = arith.truncf %17 : vector<200x32xf32> to vector<200x32xbf16>
    %c0_12 = arith.constant 0 : index
    %c0_13 = arith.constant 0 : index
    %19 = vector.load %arg6[%c0_12, %c0_13] : memref<32x72xbf16, #tpu.memory_space<vmem>>, vector<32x72xbf16>
    %cst_14 = arith.constant dense<0.000000e+00> : vector<200x72xf32>
    %20 = tpu.matmul %18, %19, %cst_14 {dimension_numbers = #tpu.dot_dimension_numbers<[1], [0], [0], [1], [0, 0, 1, 1], [], []>} : vector<200x32xbf16>, vector<32x72xbf16>, vector<200x72xf32> -> vector<200x72xf32>
    %c0_15 = arith.constant 0 : index
    %c0_16 = arith.constant 0 : index
    %21 = vector.load %arg7[%c0_15, %c0_16] : memref<1x72xf32, #tpu.memory_space<vmem>>, vector<1x72xf32>
    %22 = vector.broadcast %21 : vector<1x72xf32> to vector<200x72xf32>
    %23 = arith.addf %20, %22 : vector<200x72xf32>
    %24 = vector.extract_strided_slice %0 {offsets = [0, 5], sizes = [200, 16], strides = [1, 1]} : vector<200x21xf32> to vector<200x16xf32>
    %25 = arith.truncf %24 : vector<200x16xf32> to vector<200x16xbf16>
    %26 = arith.extf %25 : vector<200x16xbf16> to vector<200x16xf32>
    %27 = arith.subf %24, %26 : vector<200x16xf32>
    %28 = arith.truncf %27 : vector<200x16xf32> to vector<200x16xbf16>
    %c0_17 = arith.constant 0 : index
    %c0_18 = arith.constant 0 : index
    %29 = vector.load %arg8[%c0_17, %c0_18] : memref<16x72xbf16, #tpu.memory_space<vmem>>, vector<16x72xbf16>
    %cst_19 = arith.constant dense<0.000000e+00> : vector<200x72xf32>
    %30 = tpu.matmul %25, %29, %cst_19 {dimension_numbers = #tpu.dot_dimension_numbers<[1], [0], [0], [1], [0, 0, 1, 1], [], []>} : vector<200x16xbf16>, vector<16x72xbf16>, vector<200x72xf32> -> vector<200x72xf32>
    %c0_20 = arith.constant 0 : index
    %c0_21 = arith.constant 0 : index
    %31 = vector.load %arg8[%c0_20, %c0_21] : memref<16x72xbf16, #tpu.memory_space<vmem>>, vector<16x72xbf16>
    %cst_22 = arith.constant dense<0.000000e+00> : vector<200x72xf32>
    %32 = tpu.matmul %28, %31, %cst_22 {dimension_numbers = #tpu.dot_dimension_numbers<[1], [0], [0], [1], [0, 0, 1, 1], [], []>} : vector<200x16xbf16>, vector<16x72xbf16>, vector<200x72xf32> -> vector<200x72xf32>
    %33 = arith.addf %30, %32 : vector<200x72xf32>
    %34 = vector.extract_strided_slice %0 {offsets = [0, 19], sizes = [200, 1], strides = [1, 1]} : vector<200x21xf32> to vector<200x1xf32>
    %cst_23 = arith.constant 0.000000e+00 : f32
    %35 = vector.broadcast %cst_23 : f32 to vector<200x1xf32>
    %36 = arith.cmpf oeq, %34, %35 : vector<200x1xf32>
    %cst_24 = arith.constant 1.000000e+00 : f32
    %37 = vector.broadcast %cst_24 : f32 to vector<200x1xf32>
    %38 = arith.select %36, %37, %34 : vector<200x1xi1>, vector<200x1xf32>
    %39 = tpu.reciprocal %38 : vector<200x1xf32> -> vector<200x1xf32>
    %40 = vector.broadcast %39 : vector<200x1xf32> to vector<200x72xf32>
    %41 = arith.mulf %23, %40 : vector<200x72xf32>
    %42 = arith.addf %41, %33 : vector<200x72xf32>
    %c0_25 = arith.constant 0 : index
    %c0_26 = arith.constant 0 : index
    %43 = vector.load %arg9[%c0_25, %c0_26] : memref<1x72xf32, #tpu.memory_space<vmem>>, vector<1x72xf32>
    %44 = vector.broadcast %43 : vector<1x72xf32> to vector<200x72xf32>
    %45 = arith.addf %42, %44 : vector<200x72xf32>
    %c0_27 = arith.constant 0 : index
    %c0_28 = arith.constant 0 : index
    %46 = vector.load %arg10[%c0_27, %c0_28] : memref<200x72xf32, #tpu.memory_space<vmem>>, vector<200x72xf32>
    tpu.vector_store %arg10[%c0_27, %c0_28], %45 {strides = array<i32>} : memref<200x72xf32, #tpu.memory_space<vmem>>, vector<200x72xf32>,
    return
  }
  func.func @transform_0(%arg0: i32) -> (i32, i32) {
    %c0_i32 = arith.constant 0 : i32
    %c0_i32_0 = arith.constant 0 : i32
    return %arg0, %c0_i32 : i32, i32
  }
  func.func @transform_1(%arg0: i32) -> (i32, i32) {
    %c0_i32 = arith.constant 0 : i32
    %c0_i32_0 = arith.constant 0 : i32
    %c0_i32_1 = arith.constant 0 : i32
    return %c0_i32, %c0_i32_0 : i32, i32
  }
  func.func @transform_2(%arg0: i32) -> (i32, i32) {
    %c0_i32 = arith.constant 0 : i32
    %c0_i32_0 = arith.constant 0 : i32
    %c0_i32_1 = arith.constant 0 : i32
    return %c0_i32, %c0_i32_0 : i32, i32
  }
  func.func @transform_3(%arg0: i32) -> (i32, i32) {
    %c0_i32 = arith.constant 0 : i32
    %c0_i32_0 = arith.constant 0 : i32
    %c0_i32_1 = arith.constant 0 : i32
    return %c0_i32, %c0_i32_0 : i32, i32
  }
  func.func @transform_4(%arg0: i32) -> (i32, i32) {
    %c0_i32 = arith.constant 0 : i32
    %c0_i32_0 = arith.constant 0 : i32
    %c0_i32_1 = arith.constant 0 : i32
    return %c0_i32, %c0_i32_0 : i32, i32
  }
  func.func @transform_5(%arg0: i32) -> (i32, i32) {
    %c0_i32 = arith.constant 0 : i32
    %c0_i32_0 = arith.constant 0 : i32
    %c0_i32_1 = arith.constant 0 : i32
    return %c0_i32, %c0_i32_0 : i32, i32
  }
  func.func @transform_6(%arg0: i32) -> (i32, i32) {
    %c0_i32 = arith.constant 0 : i32
    %c0_i32_0 = arith.constant 0 : i32
    %c0_i32_1 = arith.constant 0 : i32
    return %c0_i32, %c0_i32_0 : i32, i32
  }
  func.func @transform_7(%arg0: i32) -> (i32, i32) {
    %c0_i32 = arith.constant 0 : i32
    %c0_i32_0 = arith.constant 0 : i32
    %c0_i32_1 = arith.constant 0 : i32
    return %c0_i32, %c0_i32_0 : i32, i32
  }
  func.func @transform_8(%arg0: i32) -> (i32, i32) {
    %c0_i32 = arith.constant 0 : i32
    %c0_i32_0 = arith.constant 0 : i32
    %c0_i32_1 = arith.constant 0 : i32
    return %c0_i32, %c0_i32_0 : i32, i32
  }
  func.func @transform_9(%arg0: i32) -> (i32, i32) {
    %c0_i32 = arith.constant 0 : i32
    %c0_i32_0 = arith.constant 0 : i32
    return %arg0, %c0_i32 : i32, i32
  }
}

</mosaic_0001>

<llo_original>
// kernel: mlp_decoder_hetero.1
$region0: #{mlp_decoder_hetero.1}
  #allocation0 [shape = 'u32[]', space=smem, size = 0x4, offset = 0x4, fixed_abs, tag = 'smem constant byte address 0x4 - core index']
  #allocation1 [shape = 'u32[144,128]{1,0:T(1,128)}', space=vmem, size = 0x12000, scoped, tag = 'internal scratch']
  %s0 = inlined_call_operand.vmem [shape: f32[200,21], index: 0, kind: input, shape index: {}]
  %s1 = inlined_call_operand.vmem [shape: bf16[16,32], index: 1, kind: input, shape index: {}]
  %s2 = inlined_call_operand.vmem [shape: f32[1,32], index: 2, kind: input, shape index: {}]
  %s3 = inlined_call_operand.vmem [shape: bf16[32,32], index: 3, kind: input, shape index: {}]
  %s4 = inlined_call_operand.vmem [shape: f32[1,32], index: 4, kind: input, shape index: {}]
  %s5 = inlined_call_operand.vmem [shape: bf16[32,72], index: 5, kind: input, shape index: {}]
  %s6 = inlined_call_operand.vmem [shape: f32[1,72], index: 6, kind: input, shape index: {}]
  %s7 = inlined_call_operand.vmem [shape: bf16[16,72], index: 7, kind: input, shape index: {}]
  %s8 = inlined_call_operand.vmem [shape: f32[1,72], index: 8, kind: input, shape index: {}]
  %s9 = inlined_call_operand.vmem [shape: f32[200,72], index: 9, kind: output, shape index: {}]
  %s10 = sld [smem:[#allocation0]]
  $region46: #{mlp_decoder_hetero.1} parent=0
    _
  %s12 = ssub.s32 1, %s10
  %s13 = scalar_select 0, %s12, %s10
  // Predicated region
  $region2: #{mlp_decoder_hetero.1} parent=0 // pred_check
    _
  $region3: #{mlp_decoder_hetero.1} parent=0 // pred_check_branch
    %15 = sbr.rel (0) target = $region5
  $region4: #{mlp_decoder_hetero.1} parent=0 // pred_region
    _
  $region5: #{mlp_decoder_hetero.1} parent=0 // pred_fallthru
    _
  // Predicated region
  $region6: #{mlp_decoder_hetero.1} parent=0 // pred_check
    _
  $region7: #{mlp_decoder_hetero.1} parent=0 // pred_check_branch
    %17 = sbr.rel (0) target = $region9
  $region8: #{mlp_decoder_hetero.1} parent=0 // pred_region
    _
  $region9: #{mlp_decoder_hetero.1} parent=0 // pred_fallthru
    _
  // Predicated region
  $region10: #{mlp_decoder_hetero.1} parent=0 // pred_check
    _
  $region11: #{mlp_decoder_hetero.1} parent=0 // pred_check_branch
    %19 = sbr.rel (0) target = $region13
  $region12: #{mlp_decoder_hetero.1} parent=0 // pred_region
    _
  $region13: #{mlp_decoder_hetero.1} parent=0 // pred_fallthru
    _
  // Predicated region
  $region14: #{mlp_decoder_hetero.1} parent=0 // pred_check
    _
  $region15: #{mlp_decoder_hetero.1} parent=0 // pred_check_branch
    %21 = sbr.rel (0) target = $region17
  $region16: #{mlp_decoder_hetero.1} parent=0 // pred_region
    _
  $region17: #{mlp_decoder_hetero.1} parent=0 // pred_fallthru
    _
  // Predicated region
  $region18: #{mlp_decoder_hetero.1} parent=0 // pred_check
    _
  $region19: #{mlp_decoder_hetero.1} parent=0 // pred_check_branch
    %23 = sbr.rel (0) target = $region21
  $region20: #{mlp_decoder_hetero.1} parent=0 // pred_region
    _
  $region21: #{mlp_decoder_hetero.1} parent=0 // pred_fallthru
    _
  // Predicated region
  $region22: #{mlp_decoder_hetero.1} parent=0 // pred_check
    _
  $region23: #{mlp_decoder_hetero.1} parent=0 // pred_check_branch
    %25 = sbr.rel (0) target = $region25
  $region24: #{mlp_decoder_hetero.1} parent=0 // pred_region
    _
  $region25: #{mlp_decoder_hetero.1} parent=0 // pred_fallthru
    _
  // Predicated region
  $region26: #{mlp_decoder_hetero.1} parent=0 // pred_check
    _
  $region27: #{mlp_decoder_hetero.1} parent=0 // pred_check_branch
    %27 = sbr.rel (0) target = $region29
  $region28: #{mlp_decoder_hetero.1} parent=0 // pred_region
    _
  $region29: #{mlp_decoder_hetero.1} parent=0 // pred_fallthru
    _
  // Predicated region
  $region30: #{mlp_decoder_hetero.1} parent=0 // pred_check
    _
  $region31: #{mlp_decoder_hetero.1} parent=0 // pred_check_branch
    %29 = sbr.rel (0) target = $region33
  $region32: #{mlp_decoder_hetero.1} parent=0 // pred_region
    _
  $region33: #{mlp_decoder_hetero.1} parent=0 // pred_fallthru
    _
  // Predicated region
  $region34: #{mlp_decoder_hetero.1} parent=0 // pred_check
    _
  $region35: #{mlp_decoder_hetero.1} parent=0 // pred_check_branch
    %31 = sbr.rel (0) target = $region37
  $region36: #{mlp_decoder_hetero.1} parent=0 // pred_region
    _
  $region37: #{mlp_decoder_hetero.1} parent=0 // pred_fallthru
    _
  %v33 = vld [vmem:[%s0] sm:$0xff]
  %v34 = vld [vmem:[%s0 + $0x8] sm:$0xff]
  %v35 = vld [vmem:[%s0 + $0x10] sm:$0xff]
  %v36 = vld [vmem:[%s0 + $0x18] sm:$0xff]
  %v37 = vld [vmem:[%s0 + $0x20] sm:$0xff]
  %v38 = vld [vmem:[%s0 + $0x28] sm:$0xff]
  %v39 = vld [vmem:[%s0 + $0x30] sm:$0xff]
  %v40 = vld [vmem:[%s0 + $0x38] sm:$0xff]
  %v41 = vld [vmem:[%s0 + $0x40] sm:$0xff]
  %v42 = vld [vmem:[%s0 + $0x48] sm:$0xff]
  %v43 = vld [vmem:[%s0 + $0x50] sm:$0xff]
  %v44 = vld [vmem:[%s0 + $0x58] sm:$0xff]
  %v45 = vld [vmem:[%s0 + $0x60] sm:$0xff]
  %v46 = vld [vmem:[%s0 + $0x68] sm:$0xff]
  %v47 = vld [vmem:[%s0 + $0x70] sm:$0xff]
  %v48 = vld [vmem:[%s0 + $0x78] sm:$0xff]
  %v49 = vld [vmem:[%s0 + $0x80] sm:$0xff]
  %v50 = vld [vmem:[%s0 + $0x88] sm:$0xff]
  %v51 = vld [vmem:[%s0 + $0x90] sm:$0xff]
  %v52 = vld [vmem:[%s0 + $0x98] sm:$0xff]
  %v53 = vld [vmem:[%s0 + $0xa0] sm:$0xff]
  %v54 = vld [vmem:[%s0 + $0xa8] sm:$0xff]
  %v55 = vld [vmem:[%s0 + $0xb0] sm:$0xff]
  %v56 = vld [vmem:[%s0 + $0xb8] sm:$0xff]
  %v57 = vld [vmem:[%s0 + $0xc0] sm:$0xff]
  %v58 = vpack.c.bf16 %v34, %v33
  %v59 = vpack.c.bf16 %v36, %v35
  %v60 = vpack.c.bf16 %v38, %v37
  %v61 = vpack.c.bf16 %v40, %v39
  %v62 = vpack.c.bf16 %v42, %v41
  %v63 = vpack.c.bf16 %v44, %v43
  %v64 = vpack.c.bf16 %v46, %v45
  %v65 = vpack.c.bf16 %v48, %v47
  %v66 = vpack.c.bf16 %v50, %v49
  %v67 = vpack.c.bf16 %v52, %v51
  %v68 = vpack.c.bf16 %v54, %v53
  %v69 = vpack.c.bf16 %v56, %v55
  %v70 = vpack.c.bf16 %v57, %v57
  %v71 = vld [vmem:[%s1] sm:$0xf]
  %v72 = vld [vmem:[%s1 + $0x4] sm:$0xf]
  %v73 = vld [vmem:[%s2] sm:$0x1]
  %v75 = vlaneseq
  %v76 = vshrl.u32 %v75, 7
  %v77 = vsub.s32 0, %v76
  %v78 = vrot.slane %v73, %v77
  %v82 = vunpack.c.l.b16 %v71
  %v83 = vunpack.c.l.b16 %v72
  %v84 = vpack.c.b16 %v83, %v82
  %vm86 = vcmask 130048
  %v88 = vsel %vm86, %v58, 0
  %v91 = vsel %vm86, %v59, 0
  %v94 = vsel %vm86, %v60, 0
  %v97 = vsel %vm86, %v61, 0
  %v100 = vsel %vm86, %v62, 0
  %v103 = vsel %vm86, %v63, 0
  %v106 = vsel %vm86, %v64, 0
  %v109 = vsel %vm86, %v65, 0
  %v112 = vsel %vm86, %v66, 0
  %v115 = vsel %vm86, %v67, 0
  %v118 = vsel %vm86, %v68, 0
  %v121 = vsel %vm86, %v69, 0
  %v124 = vsel %vm86, %v70, 0
  %126 = vmatprep.subr.bf16.mxu0 0
  %127 = vmatpush1.bf16.msra.mxu0 %v84
  %128 = vmatprep.subr.bf16.mxu0 0
  %129 = vmatpush1.bf16.msra.mxu0 0
  %130 = vmatprep.subr.bf16.mxu0 0
  %131 = vmatpush1.bf16.msra.mxu0 0
  %132 = vmatprep.subr.bf16.mxu0 0
  %133 = vmatpush1.bf16.msra.mxu0 0
  %134 = vmatprep.subr.bf16.mxu0 0
  %135 = vmatpush1.bf16.msra.mxu0 0
  %136 = vmatprep.subr.bf16.mxu0 0
  %137 = vmatpush1.bf16.msra.mxu0 0
  %138 = vmatprep.subr.bf16.mxu0 0
  %139 = vmatpush1.bf16.msra.mxu0 0
  %140 = vmatprep.subr.bf16.mxu0 0
  %141 = vmatpush1.bf16.msra.mxu0 0
  %142 = vmatprep.subr.bf16.mxu0 0
  %143 = vmatpush1.bf16.msra.mxu0 0
  %144 = vmatprep.subr.bf16.mxu0 0
  %145 = vmatpush1.bf16.msra.mxu0 0
  %146 = vmatprep.subr.bf16.mxu0 0
  %147 = vmatpush1.bf16.msra.mxu0 0
  %148 = vmatprep.subr.bf16.mxu0 0
  %149 = vmatpush1.bf16.msra.mxu0 0
  %150 = vmatprep.subr.bf16.mxu0 0
  %151 = vmatpush1.bf16.msra.mxu0 0
  %152 = vmatprep.subr.bf16.mxu0 0
  %153 = vmatpush1.bf16.msra.mxu0 0
  %154 = vmatprep.subr.bf16.mxu0 0
  %155 = vmatpush1.bf16.msra.mxu0 0
  %156 = vmatprep.subr.bf16.mxu0 0
  %157 = vmatpush1.bf16.msra.mxu0 0
  %158 = vmatprep.mubr.bf16.mxu0 0
  %159 = vmatmul.mubr.bf16.gmra.mrb[0].mxu0 %v88
  %v160 = vpop.f32.mrb[0].mxu0
  %v161 = vadd.f32 %v78, %v160
  %v162 = vpop.f32.mrb[0].mxu0
  %v163 = vpop.f32.mrb[0].mxu0
  %v164 = vadd.f32 %v78, %v163
  %v165 = vpop.f32.mrb[0].mxu0
  %166 = vmatprep.mubr.bf16.mxu0 0
  %167 = vmatmul.mubr.bf16.gmra.mrb[0].mxu0 %v91
  %v168 = vpop.f32.mrb[0].mxu0
  %v169 = vadd.f32 %v78, %v168
  %v170 = vpop.f32.mrb[0].mxu0
  %v171 = vpop.f32.mrb[0].mxu0
  %v172 = vadd.f32 %v78, %v171
  %v173 = vpop.f32.mrb[0].mxu0
  %174 = vmatprep.mubr.bf16.mxu0 0
  %175 = vmatmul.mubr.bf16.gmra.mrb[0].mxu0 %v94
  %v176 = vpop.f32.mrb[0].mxu0
  %v177 = vadd.f32 %v78, %v176
  %v178 = vpop.f32.mrb[0].mxu0
  %v179 = vpop.f32.mrb[0].mxu0
  %v180 = vadd.f32 %v78, %v179
  %v181 = vpop.f32.mrb[0].mxu0
  %182 = vmatprep.mubr.bf16.mxu0 0
  %183 = vmatmul.mubr.bf16.gmra.mrb[0].mxu0 %v97
  %v184 = vpop.f32.mrb[0].mxu0
  %v185 = vadd.f32 %v78, %v184
  %v186 = vpop.f32.mrb[0].mxu0
  %v187 = vpop.f32.mrb[0].mxu0
  %v188 = vadd.f32 %v78, %v187
  %v189 = vpop.f32.mrb[0].mxu0
  %190 = vmatprep.mubr.bf16.mxu0 0
  %191 = vmatmul.mubr.bf16.gmra.mrb[0].mxu0 %v100
  %v192 = vpop.f32.mrb[0].mxu0
  %v193 = vadd.f32 %v78, %v192
  %v194 = vpop.f32.mrb[0].mxu0
  %v195 = vpop.f32.mrb[0].mxu0
  %v196 = vadd.f32 %v78, %v195
  %v197 = vpop.f32.mrb[0].mxu0
  %198 = vmatprep.mubr.bf16.mxu0 0
  %199 = vmatmul.mubr.bf16.gmra.mrb[0].mxu0 %v103
  %v200 = vpop.f32.mrb[0].mxu0
  %v201 = vadd.f32 %v78, %v200
  %v202 = vpop.f32.mrb[0].mxu0
  %v203 = vpop.f32.mrb[0].mxu0
  %v204 = vadd.f32 %v78, %v203
  %v205 = vpop.f32.mrb[0].mxu0
  %206 = vmatprep.mubr.bf16.mxu0 0
  %207 = vmatmul.mubr.bf16.gmra.mrb[0].mxu0 %v106
  %v208 = vpop.f32.mrb[0].mxu0
  %v209 = vadd.f32 %v78, %v208
  %v210 = vpop.f32.mrb[0].mxu0
  %v211 = vpop.f32.mrb[0].mxu0
  %v212 = vadd.f32 %v78, %v211
  %v213 = vpop.f32.mrb[0].mxu0
  %214 = vmatprep.mubr.bf16.mxu0 0
  %215 = vmatmul.mubr.bf16.gmra.mrb[0].mxu0 %v109
  %v216 = vpop.f32.mrb[0].mxu0
  %v217 = vadd.f32 %v78, %v216
  %v218 = vpop.f32.mrb[0].mxu0
  %v219 = vpop.f32.mrb[0].mxu0
  %v220 = vadd.f32 %v78, %v219
  %v221 = vpop.f32.mrb[0].mxu0
  %222 = vmatprep.mubr.bf16.mxu0 0
  %223 = vmatmul.mubr.bf16.gmra.mrb[0].mxu0 %v112
  %v224 = vpop.f32.mrb[0].mxu0
  %v225 = vadd.f32 %v78, %v224
  %v226 = vpop.f32.mrb[0].mxu0
  %v227 = vpop.f32.mrb[0].mxu0
  %v228 = vadd.f32 %v78, %v227
  %v229 = vpop.f32.mrb[0].mxu0
  %230 = vmatprep.mubr.bf16.mxu0 0
  %231 = vmatmul.mubr.bf16.gmra.mrb[0].mxu0 %v115
  %v232 = vpop.f32.mrb[0].mxu0
  %v233 = vadd.f32 %v78, %v232
  %v234 = vpop.f32.mrb[0].mxu0
  %v235 = vpop.f32.mrb[0].mxu0
  %v236 = vadd.f32 %v78, %v235
  %v237 = vpop.f32.mrb[0].mxu0
  %238 = vmatprep.mubr.bf16.mxu0 0
  %239 = vmatmul.mubr.bf16.gmra.mrb[0].mxu0 %v118
  %v240 = vpop.f32.mrb[0].mxu0
  %v241 = vadd.f32 %v78, %v240
  %v242 = vpop.f32.mrb[0].mxu0
  %v243 = vpop.f32.mrb[0].mxu0
  %v244 = vadd.f32 %v78, %v243
  %v245 = vpop.f32.mrb[0].mxu0
  %246 = vmatprep.mubr.bf16.mxu0 0
  %247 = vmatmul.mubr.bf16.gmra.mrb[0].mxu0 %v121
  %v248 = vpop.f32.mrb[0].mxu0
  %v249 = vadd.f32 %v78, %v248
  %v250 = vpop.f32.mrb[0].mxu0
  %v251 = vpop.f32.mrb[0].mxu0
  %v252 = vadd.f32 %v78, %v251
  %v253 = vpop.f32.mrb[0].mxu0
  %254 = vmatprep.mubr.bf16.mxu0 0
  %255 = vmatmul.mubr.bf16.gmra.mrb[0].mxu0 %v124
  %v256 = vpop.f32.mrb[0].mxu0
  %v257 = vadd.f32 %v78, %v256
  %v258 = vpop.f32.mrb[0].mxu0
  %v259 = vpop.f32.mrb[0].mxu0
  %v260 = vpop.f32.mrb[0].mxu0
  %261 = vdwg.mxu0
  %v262 = vmax.f32 %v161, 0.0
  %v263 = vmax.f32 %v164, 0.0
  %v264 = vmax.f32 %v169, 0.0
  %v265 = vmax.f32 %v172, 0.0
  %v266 = vmax.f32 %v177, 0.0
  %v267 = vmax.f32 %v180, 0.0
  %v268 = vmax.f32 %v185, 0.0
  %v269 = vmax.f32 %v188, 0.0
  %v270 = vmax.f32 %v193, 0.0
  %v271 = vmax.f32 %v196, 0.0
  %v272 = vmax.f32 %v201, 0.0
  %v273 = vmax.f32 %v204, 0.0
  %v274 = vmax.f32 %v209, 0.0
  %v275 = vmax.f32 %v212, 0.0
  %v276 = vmax.f32 %v217, 0.0
  %v277 = vmax.f32 %v220, 0.0
  %v278 = vmax.f32 %v225, 0.0
  %v279 = vmax.f32 %v228, 0.0
  %v280 = vmax.f32 %v233, 0.0
  %v281 = vmax.f32 %v236, 0.0
  %v282 = vmax.f32 %v241, 0.0
  %v283 = vmax.f32 %v244, 0.0
  %v284 = vmax.f32 %v249, 0.0
  %v285 = vmax.f32 %v252, 0.0
  %v286 = vmax.f32 %v257, 0.0
  %v287 = vpack.c.bf16 %v263, %v262
  %v288 = vpack.c.bf16 %v265, %v264
  %v289 = vpack.c.bf16 %v267, %v266
  %v290 = vpack.c.bf16 %v269, %v268
  %v291 = vpack.c.bf16 %v271, %v270
  %v292 = vpack.c.bf16 %v273, %v272
  %v293 = vpack.c.bf16 %v275, %v274
  %v294 = vpack.c.bf16 %v277, %v276
  %v295 = vpack.c.bf16 %v279, %v278
  %v296 = vpack.c.bf16 %v281, %v280
  %v297 = vpack.c.bf16 %v283, %v282
  %v298 = vpack.c.bf16 %v285, %v284
  %v299 = vpack.c.bf16 %v286, %v286
  %v300 = vld [vmem:[%s3] sm:$0xf]
  %v301 = vld [vmem:[%s3 + $0x4] sm:$0xf]
  %v302 = vld [vmem:[%s3 + $0x8] sm:$0xf]
  %v303 = vld [vmem:[%s3 + $0xc] sm:$0xf]
  %v304 = vld [vmem:[%s4] sm:$0x1]
  %v306 = vlaneseq
  %v307 = vshrl.u32 %v306, 7
  %v308 = vsub.s32 0, %v307
  %v309 = vrot.slane %v304, %v308
  %v315 = vunpack.c.l.b16 %v300
  %v316 = vunpack.c.l.b16 %v301
  %v317 = vunpack.c.l.b16 %v302
  %v318 = vunpack.c.l.b16 %v303
  %v319 = vpack.c.b16 %v316, %v315
  %v320 = vpack.c.b16 %v318, %v317
  %vm323 = vcmask 261120
  %v325 = vsel %vm323, %v287, 0
  %v328 = vsel %vm323, %v288, 0
  %v331 = vsel %vm323, %v289, 0
  %v334 = vsel %vm323, %v290, 0
  %v337 = vsel %vm323, %v291, 0
  %v340 = vsel %vm323, %v292, 0
  %v343 = vsel %vm323, %v293, 0
  %v346 = vsel %vm323, %v294, 0
  %v349 = vsel %vm323, %v295, 0
  %v352 = vsel %vm323, %v296, 0
  %v355 = vsel %vm323, %v297, 0
  %v358 = vsel %vm323, %v298, 0
  %v361 = vsel %vm323, %v299, 0
  %363 = vmatprep.subr.bf16.mxu0 0
  %364 = vmatpush1.bf16.msra.mxu0 %v319
  %365 = vmatprep.subr.bf16.mxu0 0
  %366 = vmatpush1.bf16.msra.mxu0 %v320
  %367 = vmatprep.subr.bf16.mxu0 0
  %368 = vmatpush1.bf16.msra.mxu0 0
  %369 = vmatprep.subr.bf16.mxu0 0
  %370 = vmatpush1.bf16.msra.mxu0 0
  %371 = vmatprep.subr.bf16.mxu0 0
  %372 = vmatpush1.bf16.msra.mxu0 0
  %373 = vmatprep.subr.bf16.mxu0 0
  %374 = vmatpush1.bf16.msra.mxu0 0
  %375 = vmatprep.subr.bf16.mxu0 0
  %376 = vmatpush1.bf16.msra.mxu0 0
  %377 = vmatprep.subr.bf16.mxu0 0
  %378 = vmatpush1.bf16.msra.mxu0 0
  %379 = vmatprep.subr.bf16.mxu0 0
  %380 = vmatpush1.bf16.msra.mxu0 0
  %381 = vmatprep.subr.bf16.mxu0 0
  %382 = vmatpush1.bf16.msra.mxu0 0
  %383 = vmatprep.subr.bf16.mxu0 0
  %384 = vmatpush1.bf16.msra.mxu0 0
  %385 = vmatprep.subr.bf16.mxu0 0
  %386 = vmatpush1.bf16.msra.mxu0 0
  %387 = vmatprep.subr.bf16.mxu0 0
  %388 = vmatpush1.bf16.msra.mxu0 0
  %389 = vmatprep.subr.bf16.mxu0 0
  %390 = vmatpush1.bf16.msra.mxu0 0
  %391 = vmatprep.subr.bf16.mxu0 0
  %392 = vmatpush1.bf16.msra.mxu0 0
  %393 = vmatprep.subr.bf16.mxu0 0
  %394 = vmatpush1.bf16.msra.mxu0 0
  %395 = vmatprep.mubr.bf16.mxu0 0
  %396 = vmatmul.mubr.bf16.gmra.mrb[0].mxu0 %v325
  %v397 = vpop.f32.mrb[0].mxu0
  %v398 = vadd.f32 %v309, %v397
  %v399 = vpop.f32.mrb[0].mxu0
  %v400 = vpop.f32.mrb[0].mxu0
  %v401 = vadd.f32 %v309, %v400
  %v402 = vpop.f32.mrb[0].mxu0
  %403 = vmatprep.mubr.bf16.mxu0 0
  %404 = vmatmul.mubr.bf16.gmra.mrb[0].mxu0 %v328
  %v405 = vpop.f32.mrb[0].mxu0
  %v406 = vadd.f32 %v309, %v405
  %v407 = vpop.f32.mrb[0].mxu0
  %v408 = vpop.f32.mrb[0].mxu0
  %v409 = vadd.f32 %v309, %v408
  %v410 = vpop.f32.mrb[0].mxu0
  %411 = vmatprep.mubr.bf16.mxu0 0
  %412 = vmatmul.mubr.bf16.gmra.mrb[0].mxu0 %v331
  %v413 = vpop.f32.mrb[0].mxu0
  %v414 = vadd.f32 %v309, %v413
  %v415 = vpop.f32.mrb[0].mxu0
  %v416 = vpop.f32.mrb[0].mxu0
  %v417 = vadd.f32 %v309, %v416
  %v418 = vpop.f32.mrb[0].mxu0
  %419 = vmatprep.mubr.bf16.mxu0 0
  %420 = vmatmul.mubr.bf16.gmra.mrb[0].mxu0 %v334
  %v421 = vpop.f32.mrb[0].mxu0
  %v422 = vadd.f32 %v309, %v421
  %v423 = vpop.f32.mrb[0].mxu0
  %v424 = vpop.f32.mrb[0].mxu0
  %v425 = vadd.f32 %v309, %v424
  %v426 = vpop.f32.mrb[0].mxu0
  %427 = vmatprep.mubr.bf16.mxu0 0
  %428 = vmatmul.mubr.bf16.gmra.mrb[0].mxu0 %v337
  %v429 = vpop.f32.mrb[0].mxu0
  %v430 = vadd.f32 %v309, %v429
  %v431 = vpop.f32.mrb[0].mxu0
  %v432 = vpop.f32.mrb[0].mxu0
  %v433 = vadd.f32 %v309, %v432
  %v434 = vpop.f32.mrb[0].mxu0
  %435 = vmatprep.mubr.bf16.mxu0 0
  %436 = vmatmul.mubr.bf16.gmra.mrb[0].mxu0 %v340
  %v437 = vpop.f32.mrb[0].mxu0
  %v438 = vadd.f32 %v309, %v437
  %v439 = vpop.f32.mrb[0].mxu0
  %v440 = vpop.f32.mrb[0].mxu0
  %v441 = vadd.f32 %v309, %v440
  %v442 = vpop.f32.mrb[0].mxu0
  %443 = vmatprep.mubr.bf16.mxu0 0
  %444 = vmatmul.mubr.bf16.gmra.mrb[0].mxu0 %v343
  %v445 = vpop.f32.mrb[0].mxu0
  %v446 = vadd.f32 %v309, %v445
  %v447 = vpop.f32.mrb[0].mxu0
  %v448 = vpop.f32.mrb[0].mxu0
  %v449 = vadd.f32 %v309, %v448
  %v450 = vpop.f32.mrb[0].mxu0
  %451 = vmatprep.mubr.bf16.mxu0 0
  %452 = vmatmul.mubr.bf16.gmra.mrb[0].mxu0 %v346
  %v453 = vpop.f32.mrb[0].mxu0
  %v454 = vadd.f32 %v309, %v453
  %v455 = vpop.f32.mrb[0].mxu0
  %v456 = vpop.f32.mrb[0].mxu0
  %v457 = vadd.f32 %v309, %v456
  %v458 = vpop.f32.mrb[0].mxu0
  %459 = vmatprep.mubr.bf16.mxu0 0
  %460 = vmatmul.mubr.bf16.gmra.mrb[0].mxu0 %v349
  %v461 = vpop.f32.mrb[0].mxu0
  %v462 = vadd.f32 %v309, %v461
  %v463 = vpop.f32.mrb[0].mxu0
  %v464 = vpop.f32.mrb[0].mxu0
  %v465 = vadd.f32 %v309, %v464
  %v466 = vpop.f32.mrb[0].mxu0
  %467 = vmatprep.mubr.bf16.mxu0 0
  %468 = vmatmul.mubr.bf16.gmra.mrb[0].mxu0 %v352
  %v469 = vpop.f32.mrb[0].mxu0
  %v470 = vadd.f32 %v309, %v469
  %v471 = vpop.f32.mrb[0].mxu0
  %v472 = vpop.f32.mrb[0].mxu0
  %v473 = vadd.f32 %v309, %v472
  %v474 = vpop.f32.mrb[0].mxu0
  %475 = vmatprep.mubr.bf16.mxu0 0
  %476 = vmatmul.mubr.bf16.gmra.mrb[0].mxu0 %v355
  %v477 = vpop.f32.mrb[0].mxu0
  %v478 = vadd.f32 %v309, %v477
  %v479 = vpop.f32.mrb[0].mxu0
  %v480 = vpop.f32.mrb[0].mxu0
  %v481 = vadd.f32 %v309, %v480
  %v482 = vpop.f32.mrb[0].mxu0
  %483 = vmatprep.mubr.bf16.mxu0 0
  %484 = vmatmul.mubr.bf16.gmra.mrb[0].mxu0 %v358
  %v485 = vpop.f32.mrb[0].mxu0
  %v486 = vadd.f32 %v309, %v485
  %v487 = vpop.f32.mrb[0].mxu0
  %v488 = vpop.f32.mrb[0].mxu0
  %v489 = vadd.f32 %v309, %v488
  %v490 = vpop.f32.mrb[0].mxu0
  %491 = vmatprep.mubr.bf16.mxu0 0
  %492 = vmatmul.mubr.bf16.gmra.mrb[0].mxu0 %v361
  %v493 = vpop.f32.mrb[0].mxu0
  %v494 = vadd.f32 %v309, %v493
  %v495 = vpop.f32.mrb[0].mxu0
  %v496 = vpop.f32.mrb[0].mxu0
  %v497 = vpop.f32.mrb[0].mxu0
  %498 = vdwg.mxu0
  %v499 = vmax.f32 %v398, 0.0
  %v500 = vmax.f32 %v401, 0.0
  %v501 = vmax.f32 %v406, 0.0
  %v502 = vmax.f32 %v409, 0.0
  %v503 = vmax.f32 %v414, 0.0
  %v504 = vmax.f32 %v417, 0.0
  %v505 = vmax.f32 %v422, 0.0
  %v506 = vmax.f32 %v425, 0.0
  %v507 = vmax.f32 %v430, 0.0
  %v508 = vmax.f32 %v433, 0.0
  %v509 = vmax.f32 %v438, 0.0
  %v510 = vmax.f32 %v441, 0.0
  %v511 = vmax.f32 %v446, 0.0
  %v512 = vmax.f32 %v449, 0.0
  %v513 = vmax.f32 %v454, 0.0
  %v514 = vmax.f32 %v457, 0.0
  %v515 = vmax.f32 %v462, 0.0
  %v516 = vmax.f32 %v465, 0.0
  %v517 = vmax.f32 %v470, 0.0
  %v518 = vmax.f32 %v473, 0.0
  %v519 = vmax.f32 %v478, 0.0
  %v520 = vmax.f32 %v481, 0.0
  %v521 = vmax.f32 %v486, 0.0
  %v522 = vmax.f32 %v489, 0.0
  %v523 = vmax.f32 %v494, 0.0
  %v524 = vpack.c.bf16 %v500, %v499
  %v525 = vpack.c.bf16 %v502, %v501
  %v526 = vpack.c.bf16 %v504, %v503
  %v527 = vpack.c.bf16 %v506, %v505
  %v528 = vpack.c.bf16 %v508, %v507
  %v529 = vpack.c.bf16 %v510, %v509
  %v530 = vpack.c.bf16 %v512, %v511
  %v531 = vpack.c.bf16 %v514, %v513
  %v532 = vpack.c.bf16 %v516, %v515
  %v533 = vpack.c.bf16 %v518, %v517
  %v534 = vpack.c.bf16 %v520, %v519
  %v535 = vpack.c.bf16 %v522, %v521
  %v536 = vpack.c.bf16 %v523, %v523
  %v537 = vld [vmem:[%s5] sm:$0xf]
  %v538 = vld [vmem:[%s5 + $0x4] sm:$0xf]
  %v539 = vld [vmem:[%s5 + $0x8] sm:$0xf]
  %v540 = vld [vmem:[%s5 + $0xc] sm:$0xf]
  %v541 = vld [vmem:[%s6] sm:$0x1]
  %v543 = vlaneseq
  %v544 = vshrl.u32 %v543, 7
  %v545 = vsub.s32 0, %v544
  %v546 = vrot.slane %v541, %v545
  %v552 = vunpack.c.l.b16 %v537
  %v553 = vunpack.c.l.b16 %v538
  %v554 = vunpack.c.l.b16 %v539
  %v555 = vunpack.c.l.b16 %v540
  %v556 = vpack.c.b16 %v553, %v552
  %v557 = vpack.c.b16 %v555, %v554
  %v561 = vsel %vm323, %v524, 0
  %v564 = vsel %vm323, %v525, 0
  %v567 = vsel %vm323, %v526, 0
  %v570 = vsel %vm323, %v527, 0
  %v573 = vsel %vm323, %v528, 0
  %v576 = vsel %vm323, %v529, 0
  %v579 = vsel %vm323, %v530, 0
  %v582 = vsel %vm323, %v531, 0
  %v585 = vsel %vm323, %v532, 0
  %v588 = vsel %vm323, %v533, 0
  %v591 = vsel %vm323, %v534, 0
  %v594 = vsel %vm323, %v535, 0
  %v597 = vsel %vm323, %v536, 0
  %599 = vmatprep.subr.bf16.mxu0 0
  %600 = vmatpush1.bf16.msra.mxu0 %v556
  %601 = vmatprep.subr.bf16.mxu0 0
  %602 = vmatpush1.bf16.msra.mxu0 %v557
  %603 = vmatprep.subr.bf16.mxu0 0
  %604 = vmatpush1.bf16.msra.mxu0 0
  %605 = vmatprep.subr.bf16.mxu0 0
  %606 = vmatpush1.bf16.msra.mxu0 0
  %607 = vmatprep.subr.bf16.mxu0 0
  %608 = vmatpush1.bf16.msra.mxu0 0
  %609 = vmatprep.subr.bf16.mxu0 0
  %610 = vmatpush1.bf16.msra.mxu0 0
  %611 = vmatprep.subr.bf16.mxu0 0
  %612 = vmatpush1.bf16.msra.mxu0 0
  %613 = vmatprep.subr.bf16.mxu0 0
  %614 = vmatpush1.bf16.msra.mxu0 0
  %615 = vmatprep.subr.bf16.mxu0 0
  %616 = vmatpush1.bf16.msra.mxu0 0
  %617 = vmatprep.subr.bf16.mxu0 0
  %618 = vmatpush1.bf16.msra.mxu0 0
  %619 = vmatprep.subr.bf16.mxu0 0
  %620 = vmatpush1.bf16.msra.mxu0 0
  %621 = vmatprep.subr.bf16.mxu0 0
  %622 = vmatpush1.bf16.msra.mxu0 0
  %623 = vmatprep.subr.bf16.mxu0 0
  %624 = vmatpush1.bf16.msra.mxu0 0
  %625 = vmatprep.subr.bf16.mxu0 0
  %626 = vmatpush1.bf16.msra.mxu0 0
  %627 = vmatprep.subr.bf16.mxu0 0
  %628 = vmatpush1.bf16.msra.mxu0 0
  %629 = vmatprep.subr.bf16.mxu0 0
  %630 = vmatpush1.bf16.msra.mxu0 0
  %631 = vmatprep.mubr.bf16.mxu0 0
  %632 = vmatmul.mubr.bf16.gmra.mrb[0].mxu0 %v561
  %v633 = vpop.f32.mrb[0].mxu0
  %v634 = vadd.f32 %v546, %v633
  %v635 = vpop.f32.mrb[0].mxu0
  %v636 = vpop.f32.mrb[0].mxu0
  %v637 = vadd.f32 %v546, %v636
  %v638 = vpop.f32.mrb[0].mxu0
  %639 = vmatprep.mubr.bf16.mxu0 0
  %640 = vmatmul.mubr.bf16.gmra.mrb[0].mxu0 %v564
  %v641 = vpop.f32.mrb[0].mxu0
  %v642 = vadd.f32 %v546, %v641
  %v643 = vpop.f32.mrb[0].mxu0
  %v644 = vpop.f32.mrb[0].mxu0
  %v645 = vadd.f32 %v546, %v644
  %v646 = vpop.f32.mrb[0].mxu0
  %647 = vmatprep.mubr.bf16.mxu0 0
  %648 = vmatmul.mubr.bf16.gmra.mrb[0].mxu0 %v567
  %v649 = vpop.f32.mrb[0].mxu0
  %v650 = vadd.f32 %v546, %v649
  %v651 = vpop.f32.mrb[0].mxu0
  %v652 = vpop.f32.mrb[0].mxu0
  %v653 = vadd.f32 %v546, %v652
  %v654 = vpop.f32.mrb[0].mxu0
  %655 = vmatprep.mubr.bf16.mxu0 0
  %656 = vmatmul.mubr.bf16.gmra.mrb[0].mxu0 %v570
  %v657 = vpop.f32.mrb[0].mxu0
  %v658 = vadd.f32 %v546, %v657
  %v659 = vpop.f32.mrb[0].mxu0
  %v660 = vpop.f32.mrb[0].mxu0
  %v661 = vadd.f32 %v546, %v660
  %v662 = vpop.f32.mrb[0].mxu0
  %663 = vmatprep.mubr.bf16.mxu0 0
  %664 = vmatmul.mubr.bf16.gmra.mrb[0].mxu0 %v573
  %v665 = vpop.f32.mrb[0].mxu0
  %v666 = vadd.f32 %v546, %v665
  %v667 = vpop.f32.mrb[0].mxu0
  %v668 = vpop.f32.mrb[0].mxu0
  %v669 = vadd.f32 %v546, %v668
  %v670 = vpop.f32.mrb[0].mxu0
  %671 = vmatprep.mubr.bf16.mxu0 0
  %672 = vmatmul.mubr.bf16.gmra.mrb[0].mxu0 %v576
  %v673 = vpop.f32.mrb[0].mxu0
  %v674 = vadd.f32 %v546, %v673
  %v675 = vpop.f32.mrb[0].mxu0
  %v676 = vpop.f32.mrb[0].mxu0
  %v677 = vadd.f32 %v546, %v676
  %v678 = vpop.f32.mrb[0].mxu0
  %679 = vmatprep.mubr.bf16.mxu0 0
  %680 = vmatmul.mubr.bf16.gmra.mrb[0].mxu0 %v579
  %v681 = vpop.f32.mrb[0].mxu0
  %v682 = vadd.f32 %v546, %v681
  %v683 = vpop.f32.mrb[0].mxu0
  %v684 = vpop.f32.mrb[0].mxu0
  %v685 = vadd.f32 %v546, %v684
  %v686 = vpop.f32.mrb[0].mxu0
  %687 = vmatprep.mubr.bf16.mxu0 0
  %688 = vmatmul.mubr.bf16.gmra.mrb[0].mxu0 %v582
  %v689 = vpop.f32.mrb[0].mxu0
  %v690 = vadd.f32 %v546, %v689
  %v691 = vpop.f32.mrb[0].mxu0
  %v692 = vpop.f32.mrb[0].mxu0
  %v693 = vadd.f32 %v546, %v692
  %v694 = vpop.f32.mrb[0].mxu0
  %695 = vmatprep.mubr.bf16.mxu0 0
  %696 = vmatmul.mubr.bf16.gmra.mrb[0].mxu0 %v585
  %v697 = vpop.f32.mrb[0].mxu0
  %v698 = vadd.f32 %v546, %v697
  %v699 = vpop.f32.mrb[0].mxu0
  %v700 = vpop.f32.mrb[0].mxu0
  %v701 = vadd.f32 %v546, %v700
  %v702 = vpop.f32.mrb[0].mxu0
  %703 = vmatprep.mubr.bf16.mxu0 0
  %704 = vmatmul.mubr.bf16.gmra.mrb[0].mxu0 %v588
  %v705 = vpop.f32.mrb[0].mxu0
  %v706 = vadd.f32 %v546, %v705
  %v707 = vpop.f32.mrb[0].mxu0
  %v708 = vpop.f32.mrb[0].mxu0
  %v709 = vadd.f32 %v546, %v708
  %v710 = vpop.f32.mrb[0].mxu0
  %711 = vmatprep.mubr.bf16.mxu0 0
  %712 = vmatmul.mubr.bf16.gmra.mrb[0].mxu0 %v591
  %v713 = vpop.f32.mrb[0].mxu0
  %v714 = vadd.f32 %v546, %v713
  %v715 = vpop.f32.mrb[0].mxu0
  %v716 = vpop.f32.mrb[0].mxu0
  %v717 = vadd.f32 %v546, %v716
  %v718 = vpop.f32.mrb[0].mxu0
  %719 = vmatprep.mubr.bf16.mxu0 0
  %720 = vmatmul.mubr.bf16.gmra.mrb[0].mxu0 %v594
  %v721 = vpop.f32.mrb[0].mxu0
  %v722 = vadd.f32 %v546, %v721
  %v723 = vpop.f32.mrb[0].mxu0
  %v724 = vpop.f32.mrb[0].mxu0
  %v725 = vadd.f32 %v546, %v724
  %v726 = vpop.f32.mrb[0].mxu0
  %727 = vmatprep.mubr.bf16.mxu0 0
  %728 = vmatmul.mubr.bf16.gmra.mrb[0].mxu0 %v597
  %v729 = vpop.f32.mrb[0].mxu0
  %v730 = vadd.f32 %v546, %v729
  %v731 = vpop.f32.mrb[0].mxu0
  %v732 = vpop.f32.mrb[0].mxu0
  %v733 = vpop.f32.mrb[0].mxu0
  %734 = vdwg.mxu0
  %v735 = vunpack.c.l.bf16 %v58
  %v736 = vunpack.c.h.bf16 %v58
  %v737 = vunpack.c.l.bf16 %v59
  %v738 = vunpack.c.h.bf16 %v59
  %v739 = vunpack.c.l.bf16 %v60
  %v740 = vunpack.c.h.bf16 %v60
  %v741 = vunpack.c.l.bf16 %v61
  %v742 = vunpack.c.h.bf16 %v61
  %v743 = vunpack.c.l.bf16 %v62
  %v744 = vunpack.c.h.bf16 %v62
  %v745 = vunpack.c.l.bf16 %v63
  %v746 = vunpack.c.h.bf16 %v63
  %v747 = vunpack.c.l.bf16 %v64
  %v748 = vunpack.c.h.bf16 %v64
  %v749 = vunpack.c.l.bf16 %v65
  %v750 = vunpack.c.h.bf16 %v65
  %v751 = vunpack.c.l.bf16 %v66
  %v752 = vunpack.c.h.bf16 %v66
  %v753 = vunpack.c.l.bf16 %v67
  %v754 = vunpack.c.h.bf16 %v67
  %v755 = vunpack.c.l.bf16 %v68
  %v756 = vunpack.c.h.bf16 %v68
  %v757 = vunpack.c.l.bf16 %v69
  %v758 = vunpack.c.h.bf16 %v69
  %v759 = vunpack.c.l.bf16 %v70
  %v760 = vsub.f32 %v33, %v735
  %v761 = vsub.f32 %v34, %v736
  %v762 = vsub.f32 %v35, %v737
  %v763 = vsub.f32 %v36, %v738
  %v764 = vsub.f32 %v37, %v739
  %v765 = vsub.f32 %v38, %v740
  %v766 = vsub.f32 %v39, %v741
  %v767 = vsub.f32 %v40, %v742
  %v768 = vsub.f32 %v41, %v743
  %v769 = vsub.f32 %v42, %v744
  %v770 = vsub.f32 %v43, %v745
  %v771 = vsub.f32 %v44, %v746
  %v772 = vsub.f32 %v45, %v747
  %v773 = vsub.f32 %v46, %v748
  %v774 = vsub.f32 %v47, %v749
  %v775 = vsub.f32 %v48, %v750
  %v776 = vsub.f32 %v49, %v751
  %v777 = vsub.f32 %v50, %v752
  %v778 = vsub.f32 %v51, %v753
  %v779 = vsub.f32 %v52, %v754
  %v780 = vsub.f32 %v53, %v755
  %v781 = vsub.f32 %v54, %v756
  %v782 = vsub.f32 %v55, %v757
  %v783 = vsub.f32 %v56, %v758
  %v784 = vsub.f32 %v57, %v759
  %v785 = vpack.c.bf16 %v761, %v760
  %v786 = vpack.c.bf16 %v763, %v762
  %v787 = vpack.c.bf16 %v765, %v764
  %v788 = vpack.c.bf16 %v767, %v766
  %v789 = vpack.c.bf16 %v769, %v768
  %v790 = vpack.c.bf16 %v771, %v770
  %v791 = vpack.c.bf16 %v773, %v772
  %v792 = vpack.c.bf16 %v775, %v774
  %v793 = vpack.c.bf16 %v777, %v776
  %v794 = vpack.c.bf16 %v779, %v778
  %v795 = vpack.c.bf16 %v781, %v780
  %v796 = vpack.c.bf16 %v783, %v782
  %v797 = vpack.c.bf16 %v784, %v784
  %v798 = vld [vmem:[%s7] sm:$0xf]
  %v799 = vld [vmem:[%s7 + $0x4] sm:$0xf]
  %813 = vrot.lane.b32.xlu0 %v785, 123
  %v814 = vpop.permute.xlu0 %813
  %815 = vrot.lane.b32.xlu0 %v786, 123
  %v816 = vpop.permute.xlu0 %815
  %817 = vrot.lane.b32.xlu0 %v787, 123
  %v818 = vpop.permute.xlu0 %817
  %819 = vrot.lane.b32.xlu0 %v788, 123
  %v820 = vpop.permute.xlu0 %819
  %821 = vrot.lane.b32.xlu0 %v789, 123
  %v822 = vpop.permute.xlu0 %821
  %823 = vrot.lane.b32.xlu0 %v790, 123
  %v824 = vpop.permute.xlu0 %823
  %825 = vrot.lane.b32.xlu0 %v791, 123
  %v826 = vpop.permute.xlu0 %825
  %827 = vrot.lane.b32.xlu0 %v792, 123
  %v828 = vpop.permute.xlu0 %827
  %829 = vrot.lane.b32.xlu0 %v793, 123
  %v830 = vpop.permute.xlu0 %829
  %831 = vrot.lane.b32.xlu0 %v794, 123
  %v832 = vpop.permute.xlu0 %831
  %833 = vrot.lane.b32.xlu0 %v795, 123
  %v834 = vpop.permute.xlu0 %833
  %835 = vrot.lane.b32.xlu0 %v796, 123
  %v836 = vpop.permute.xlu0 %835
  %837 = vrot.lane.b32.xlu0 %v797, 123
  %v838 = vpop.permute.xlu0 %837
  %v841 = vunpack.c.l.b16 %v798
  %v842 = vunpack.c.l.b16 %v799
  %v843 = vpack.c.b16 %v842, %v841
  %v846 = vsel %vm86, %v814, 0
  %v849 = vsel %vm86, %v816, 0
  %v852 = vsel %vm86, %v818, 0
  %v855 = vsel %vm86, %v820, 0
  %v858 = vsel %vm86, %v822, 0
  %v861 = vsel %vm86, %v824, 0
  %v864 = vsel %vm86, %v826, 0
  %v867 = vsel %vm86, %v828, 0
  %v870 = vsel %vm86, %v830, 0
  %v873 = vsel %vm86, %v832, 0
  %v876 = vsel %vm86, %v834, 0
  %v879 = vsel %vm86, %v836, 0
  %v882 = vsel %vm86, %v838, 0
  %884 = vmatprep.subr.bf16.mxu0 0
  %885 = vmatpush1.bf16.msra.mxu0 %v843
  %886 = vmatprep.subr.bf16.mxu0 0
  %887 = vmatpush1.bf16.msra.mxu0 0
  %888 = vmatprep.subr.bf16.mxu0 0
  %889 = vmatpush1.bf16.msra.mxu0 0
  %890 = vmatprep.subr.bf16.mxu0 0
  %891 = vmatpush1.bf16.msra.mxu0 0
  %892 = vmatprep.subr.bf16.mxu0 0
  %893 = vmatpush1.bf16.msra.mxu0 0
  %894 = vmatprep.subr.bf16.mxu0 0
  %895 = vmatpush1.bf16.msra.mxu0 0
  %896 = vmatprep.subr.bf16.mxu0 0
  %897 = vmatpush1.bf16.msra.mxu0 0
  %898 = vmatprep.subr.bf16.mxu0 0
  %899 = vmatpush1.bf16.msra.mxu0 0
  %900 = vmatprep.subr.bf16.mxu0 0
  %901 = vmatpush1.bf16.msra.mxu0 0
  %902 = vmatprep.subr.bf16.mxu0 0
  %903 = vmatpush1.bf16.msra.mxu0 0
  %904 = vmatprep.subr.bf16.mxu0 0
  %905 = vmatpush1.bf16.msra.mxu0 0
  %906 = vmatprep.subr.bf16.mxu0 0
  %907 = vmatpush1.bf16.msra.mxu0 0
  %908 = vmatprep.subr.bf16.mxu0 0
  %909 = vmatpush1.bf16.msra.mxu0 0
  %910 = vmatprep.subr.bf16.mxu0 0
  %911 = vmatpush1.bf16.msra.mxu0 0
  %912 = vmatprep.subr.bf16.mxu0 0
  %913 = vmatpush1.bf16.msra.mxu0 0
  %914 = vmatprep.subr.bf16.mxu0 0
  %915 = vmatpush1.bf16.msra.mxu0 0
  %916 = vmatprep.mubr.bf16.mxu0 0
  %917 = vmatmul.mubr.bf16.gmra.mrb[0].mxu0 %v846
  %v918 = vpop.f32.mrb[0].mxu0
  %v919 = vadd.f32 0.0, %v918
  %v920 = vpop.f32.mrb[0].mxu0
  %v921 = vpop.f32.mrb[0].mxu0
  %v922 = vadd.f32 0.0, %v921
  %v923 = vpop.f32.mrb[0].mxu0
  %924 = vmatprep.mubr.bf16.mxu0 0
  %925 = vmatmul.mubr.bf16.gmra.mrb[0].mxu0 %v849
  %v926 = vpop.f32.mrb[0].mxu0
  %v927 = vadd.f32 0.0, %v926
  %v928 = vpop.f32.mrb[0].mxu0
  %v929 = vpop.f32.mrb[0].mxu0
  %v930 = vadd.f32 0.0, %v929
  %v931 = vpop.f32.mrb[0].mxu0
  %932 = vmatprep.mubr.bf16.mxu0 0
  %933 = vmatmul.mubr.bf16.gmra.mrb[0].mxu0 %v852
  %v934 = vpop.f32.mrb[0].mxu0
  %v935 = vadd.f32 0.0, %v934
  %v936 = vpop.f32.mrb[0].mxu0
  %v937 = vpop.f32.mrb[0].mxu0
  %v938 = vadd.f32 0.0, %v937
  %v939 = vpop.f32.mrb[0].mxu0
  %940 = vmatprep.mubr.bf16.mxu0 0
  %941 = vmatmul.mubr.bf16.gmra.mrb[0].mxu0 %v855
  %v942 = vpop.f32.mrb[0].mxu0
  %v943 = vadd.f32 0.0, %v942
  %v944 = vpop.f32.mrb[0].mxu0
  %v945 = vpop.f32.mrb[0].mxu0
  %v946 = vadd.f32 0.0, %v945
  %v947 = vpop.f32.mrb[0].mxu0
  %948 = vmatprep.mubr.bf16.mxu0 0
  %949 = vmatmul.mubr.bf16.gmra.mrb[0].mxu0 %v858
  %v950 = vpop.f32.mrb[0].mxu0
  %v951 = vadd.f32 0.0, %v950
  %v952 = vpop.f32.mrb[0].mxu0
  %v953 = vpop.f32.mrb[0].mxu0
  %v954 = vadd.f32 0.0, %v953
  %v955 = vpop.f32.mrb[0].mxu0
  %956 = vmatprep.mubr.bf16.mxu0 0
  %957 = vmatmul.mubr.bf16.gmra.mrb[0].mxu0 %v861
  %v958 = vpop.f32.mrb[0].mxu0
  %v959 = vadd.f32 0.0, %v958
  %v960 = vpop.f32.mrb[0].mxu0
  %v961 = vpop.f32.mrb[0].mxu0
  %v962 = vadd.f32 0.0, %v961
  %v963 = vpop.f32.mrb[0].mxu0
  %964 = vmatprep.mubr.bf16.mxu0 0
  %965 = vmatmul.mubr.bf16.gmra.mrb[0].mxu0 %v864
  %v966 = vpop.f32.mrb[0].mxu0
  %v967 = vadd.f32 0.0, %v966
  %v968 = vpop.f32.mrb[0].mxu0
  %v969 = vpop.f32.mrb[0].mxu0
  %v970 = vadd.f32 0.0, %v969
  %v971 = vpop.f32.mrb[0].mxu0
  %972 = vmatprep.mubr.bf16.mxu0 0
  %973 = vmatmul.mubr.bf16.gmra.mrb[0].mxu0 %v867
  %v974 = vpop.f32.mrb[0].mxu0
  %v975 = vadd.f32 0.0, %v974
  %v976 = vpop.f32.mrb[0].mxu0
  %v977 = vpop.f32.mrb[0].mxu0
  %v978 = vadd.f32 0.0, %v977
  %v979 = vpop.f32.mrb[0].mxu0
  %980 = vmatprep.mubr.bf16.mxu0 0
  %981 = vmatmul.mubr.bf16.gmra.mrb[0].mxu0 %v870
  %v982 = vpop.f32.mrb[0].mxu0
  %v983 = vadd.f32 0.0, %v982
  %v984 = vpop.f32.mrb[0].mxu0
  %v985 = vpop.f32.mrb[0].mxu0
  %v986 = vadd.f32 0.0, %v985
  %v987 = vpop.f32.mrb[0].mxu0
  %988 = vmatprep.mubr.bf16.mxu0 0
  %989 = vmatmul.mubr.bf16.gmra.mrb[0].mxu0 %v873
  %v990 = vpop.f32.mrb[0].mxu0
  %v991 = vadd.f32 0.0, %v990
  %v992 = vpop.f32.mrb[0].mxu0
  %v993 = vpop.f32.mrb[0].mxu0
  %v994 = vadd.f32 0.0, %v993
  %v995 = vpop.f32.mrb[0].mxu0
  %996 = vmatprep.mubr.bf16.mxu0 0
  %997 = vmatmul.mubr.bf16.gmra.mrb[0].mxu0 %v876
  %v998 = vpop.f32.mrb[0].mxu0
  %v999 = vadd.f32 0.0, %v998
  %v1000 = vpop.f32.mrb[0].mxu0
  %v1001 = vpop.f32.mrb[0].mxu0
  %v1002 = vadd.f32 0.0, %v1001
  %v1003 = vpop.f32.mrb[0].mxu0
  %1004 = vmatprep.mubr.bf16.mxu0 0
  %1005 = vmatmul.mubr.bf16.gmra.mrb[0].mxu0 %v879
  %v1006 = vpop.f32.mrb[0].mxu0
  %v1007 = vadd.f32 0.0, %v1006
  %v1008 = vpop.f32.mrb[0].mxu0
  %v1009 = vpop.f32.mrb[0].mxu0
  %v1010 = vadd.f32 0.0, %v1009
  %v1011 = vpop.f32.mrb[0].mxu0
  %1012 = vmatprep.mubr.bf16.mxu0 0
  %1013 = vmatmul.mubr.bf16.gmra.mrb[0].mxu0 %v882
  %v1014 = vpop.f32.mrb[0].mxu0
  %v1015 = vadd.f32 0.0, %v1014
  %v1016 = vpop.f32.mrb[0].mxu0
  %v1017 = vpop.f32.mrb[0].mxu0
  %v1018 = vpop.f32.mrb[0].mxu0
  %1019 = vdwg.mxu0
  %1033 = vrot.lane.b32.xlu0 %v58, 123
  %v1034 = vpop.permute.xlu0 %1033
  %1035 = vrot.lane.b32.xlu0 %v59, 123
  %v1036 = vpop.permute.xlu0 %1035
  %1037 = vrot.lane.b32.xlu0 %v60, 123
  %v1038 = vpop.permute.xlu0 %1037
  %1039 = vrot.lane.b32.xlu0 %v61, 123
  %v1040 = vpop.permute.xlu0 %1039
  %1041 = vrot.lane.b32.xlu0 %v62, 123
  %v1042 = vpop.permute.xlu0 %1041
  %1043 = vrot.lane.b32.xlu0 %v63, 123
  %v1044 = vpop.permute.xlu0 %1043
  %1045 = vrot.lane.b32.xlu0 %v64, 123
  %v1046 = vpop.permute.xlu0 %1045
  %1047 = vrot.lane.b32.xlu0 %v65, 123
  %v1048 = vpop.permute.xlu0 %1047
  %1049 = vrot.lane.b32.xlu0 %v66, 123
  %v1050 = vpop.permute.xlu0 %1049
  %1051 = vrot.lane.b32.xlu0 %v67, 123
  %v1052 = vpop.permute.xlu0 %1051
  %1053 = vrot.lane.b32.xlu0 %v68, 123
  %v1054 = vpop.permute.xlu0 %1053
  %1055 = vrot.lane.b32.xlu0 %v69, 123
  %v1056 = vpop.permute.xlu0 %1055
  %1057 = vrot.lane.b32.xlu0 %v70, 123
  %v1058 = vpop.permute.xlu0 %1057
  %v1060 = vsel %vm86, %v1034, 0
  %v1063 = vsel %vm86, %v1036, 0
  %v1066 = vsel %vm86, %v1038, 0
  %v1069 = vsel %vm86, %v1040, 0
  %v1072 = vsel %vm86, %v1042, 0
  %v1075 = vsel %vm86, %v1044, 0
  %v1078 = vsel %vm86, %v1046, 0
  %v1081 = vsel %vm86, %v1048, 0
  %v1084 = vsel %vm86, %v1050, 0
  %v1087 = vsel %vm86, %v1052, 0
  %v1090 = vsel %vm86, %v1054, 0
  %v1093 = vsel %vm86, %v1056, 0
  %v1096 = vsel %vm86, %v1058, 0
  %1098 = vmatprep.subr.bf16.mxu0 0
  %1099 = vmatpush1.bf16.msra.mxu0 %v843
  %1100 = vmatprep.subr.bf16.mxu0 0
  %1101 = vmatpush1.bf16.msra.mxu0 0
  %1102 = vmatprep.subr.bf16.mxu0 0
  %1103 = vmatpush1.bf16.msra.mxu0 0
  %1104 = vmatprep.subr.bf16.mxu0 0
  %1105 = vmatpush1.bf16.msra.mxu0 0
  %1106 = vmatprep.subr.bf16.mxu0 0
  %1107 = vmatpush1.bf16.msra.mxu0 0
  %1108 = vmatprep.subr.bf16.mxu0 0
  %1109 = vmatpush1.bf16.msra.mxu0 0
  %1110 = vmatprep.subr.bf16.mxu0 0
  %1111 = vmatpush1.bf16.msra.mxu0 0
  %1112 = vmatprep.subr.bf16.mxu0 0
  %1113 = vmatpush1.bf16.msra.mxu0 0
  %1114 = vmatprep.subr.bf16.mxu0 0
  %1115 = vmatpush1.bf16.msra.mxu0 0
  %1116 = vmatprep.subr.bf16.mxu0 0
  %1117 = vmatpush1.bf16.msra.mxu0 0
  %1118 = vmatprep.subr.bf16.mxu0 0
  %1119 = vmatpush1.bf16.msra.mxu0 0
  %1120 = vmatprep.subr.bf16.mxu0 0
  %1121 = vmatpush1.bf16.msra.mxu0 0
  %1122 = vmatprep.subr.bf16.mxu0 0
  %1123 = vmatpush1.bf16.msra.mxu0 0
  %1124 = vmatprep.subr.bf16.mxu0 0
  %1125 = vmatpush1.bf16.msra.mxu0 0
  %1126 = vmatprep.subr.bf16.mxu0 0
  %1127 = vmatpush1.bf16.msra.mxu0 0
  %1128 = vmatprep.subr.bf16.mxu0 0
  %1129 = vmatpush1.bf16.msra.mxu0 0
  %1130 = vmatprep.mubr.bf16.mxu0 0
  %1131 = vmatmul.mubr.bf16.gmra.mrb[0].mxu0 %v1060
  %v1132 = vpop.f32.mrb[0].mxu0
  %v1133 = vadd.f32 %v919, %v1132
  %v1134 = vpop.f32.mrb[0].mxu0
  %v1135 = vpop.f32.mrb[0].mxu0
  %v1136 = vadd.f32 %v922, %v1135
  %v1137 = vpop.f32.mrb[0].mxu0
  %1138 = vmatprep.mubr.bf16.mxu0 0
  %1139 = vmatmul.mubr.bf16.gmra.mrb[0].mxu0 %v1063
  %v1140 = vpop.f32.mrb[0].mxu0
  %v1141 = vadd.f32 %v927, %v1140
  %v1142 = vpop.f32.mrb[0].mxu0
  %v1143 = vpop.f32.mrb[0].mxu0
  %v1144 = vadd.f32 %v930, %v1143
  %v1145 = vpop.f32.mrb[0].mxu0
  %1146 = vmatprep.mubr.bf16.mxu0 0
  %1147 = vmatmul.mubr.bf16.gmra.mrb[0].mxu0 %v1066
  %v1148 = vpop.f32.mrb[0].mxu0
  %v1149 = vadd.f32 %v935, %v1148
  %v1150 = vpop.f32.mrb[0].mxu0
  %v1151 = vpop.f32.mrb[0].mxu0
  %v1152 = vadd.f32 %v938, %v1151
  %v1153 = vpop.f32.mrb[0].mxu0
  %1154 = vmatprep.mubr.bf16.mxu0 0
  %1155 = vmatmul.mubr.bf16.gmra.mrb[0].mxu0 %v1069
  %v1156 = vpop.f32.mrb[0].mxu0
  %v1157 = vadd.f32 %v943, %v1156
  %v1158 = vpop.f32.mrb[0].mxu0
  %v1159 = vpop.f32.mrb[0].mxu0
  %v1160 = vadd.f32 %v946, %v1159
  %v1161 = vpop.f32.mrb[0].mxu0
  %1162 = vmatprep.mubr.bf16.mxu0 0
  %1163 = vmatmul.mubr.bf16.gmra.mrb[0].mxu0 %v1072
  %v1164 = vpop.f32.mrb[0].mxu0
  %v1165 = vadd.f32 %v951, %v1164
  %v1166 = vpop.f32.mrb[0].mxu0
  %v1167 = vpop.f32.mrb[0].mxu0
  %v1168 = vadd.f32 %v954, %v1167
  %v1169 = vpop.f32.mrb[0].mxu0
  %1170 = vmatprep.mubr.bf16.mxu0 0
  %1171 = vmatmul.mubr.bf16.gmra.mrb[0].mxu0 %v1075
  %v1172 = vpop.f32.mrb[0].mxu0
  %v1173 = vadd.f32 %v959, %v1172
  %v1174 = vpop.f32.mrb[0].mxu0
  %v1175 = vpop.f32.mrb[0].mxu0
  %v1176 = vadd.f32 %v962, %v1175
  %v1177 = vpop.f32.mrb[0].mxu0
  %1178 = vmatprep.mubr.bf16.mxu0 0
  %1179 = vmatmul.mubr.bf16.gmra.mrb[0].mxu0 %v1078
  %v1180 = vpop.f32.mrb[0].mxu0
  %v1181 = vadd.f32 %v967, %v1180
  %v1182 = vpop.f32.mrb[0].mxu0
  %v1183 = vpop.f32.mrb[0].mxu0
  %v1184 = vadd.f32 %v970, %v1183
  %v1185 = vpop.f32.mrb[0].mxu0
  %1186 = vmatprep.mubr.bf16.mxu0 0
  %1187 = vmatmul.mubr.bf16.gmra.mrb[0].mxu0 %v1081
  %v1188 = vpop.f32.mrb[0].mxu0
  %v1189 = vadd.f32 %v975, %v1188
  %v1190 = vpop.f32.mrb[0].mxu0
  %v1191 = vpop.f32.mrb[0].mxu0
  %v1192 = vadd.f32 %v978, %v1191
  %v1193 = vpop.f32.mrb[0].mxu0
  %1194 = vmatprep.mubr.bf16.mxu0 0
  %1195 = vmatmul.mubr.bf16.gmra.mrb[0].mxu0 %v1084
  %v1196 = vpop.f32.mrb[0].mxu0
  %v1197 = vadd.f32 %v983, %v1196
  %v1198 = vpop.f32.mrb[0].mxu0
  %v1199 = vpop.f32.mrb[0].mxu0
  %v1200 = vadd.f32 %v986, %v1199
  %v1201 = vpop.f32.mrb[0].mxu0
  %1202 = vmatprep.mubr.bf16.mxu0 0
  %1203 = vmatmul.mubr.bf16.gmra.mrb[0].mxu0 %v1087
  %v1204 = vpop.f32.mrb[0].mxu0
  %v1205 = vadd.f32 %v991, %v1204
  %v1206 = vpop.f32.mrb[0].mxu0
  %v1207 = vpop.f32.mrb[0].mxu0
  %v1208 = vadd.f32 %v994, %v1207
  %v1209 = vpop.f32.mrb[0].mxu0
  %1210 = vmatprep.mubr.bf16.mxu0 0
  %1211 = vmatmul.mubr.bf16.gmra.mrb[0].mxu0 %v1090
  %v1212 = vpop.f32.mrb[0].mxu0
  %v1213 = vadd.f32 %v999, %v1212
  %v1214 = vpop.f32.mrb[0].mxu0
  %v1215 = vpop.f32.mrb[0].mxu0
  %v1216 = vadd.f32 %v1002, %v1215
  %v1217 = vpop.f32.mrb[0].mxu0
  %1218 = vmatprep.mubr.bf16.mxu0 0
  %1219 = vmatmul.mubr.bf16.gmra.mrb[0].mxu0 %v1093
  %v1220 = vpop.f32.mrb[0].mxu0
  %v1221 = vadd.f32 %v1007, %v1220
  %v1222 = vpop.f32.mrb[0].mxu0
  %v1223 = vpop.f32.mrb[0].mxu0
  %v1224 = vadd.f32 %v1010, %v1223
  %v1225 = vpop.f32.mrb[0].mxu0
  %1226 = vmatprep.mubr.bf16.mxu0 0
  %1227 = vmatmul.mubr.bf16.gmra.mrb[0].mxu0 %v1096
  %v1228 = vpop.f32.mrb[0].mxu0
  %v1229 = vadd.f32 %v1015, %v1228
  %v1230 = vpop.f32.mrb[0].mxu0
  %v1231 = vpop.f32.mrb[0].mxu0
  %v1232 = vpop.f32.mrb[0].mxu0
  %1233 = vdwg.mxu0
  %vm1234 = vcmp.eq.f32.partialorder %v33, 0.0
  %vm1235 = vcmp.eq.f32.partialorder %v34, 0.0
  %vm1236 = vcmp.eq.f32.partialorder %v35, 0.0
  %vm1237 = vcmp.eq.f32.partialorder %v36, 0.0
  %vm1238 = vcmp.eq.f32.partialorder %v37, 0.0
  %vm1239 = vcmp.eq.f32.partialorder %v38, 0.0
  %vm1240 = vcmp.eq.f32.partialorder %v39, 0.0
  %vm1241 = vcmp.eq.f32.partialorder %v40, 0.0
  %vm1242 = vcmp.eq.f32.partialorder %v41, 0.0
  %vm1243 = vcmp.eq.f32.partialorder %v42, 0.0
  %vm1244 = vcmp.eq.f32.partialorder %v43, 0.0
  %vm1245 = vcmp.eq.f32.partialorder %v44, 0.0
  %vm1246 = vcmp.eq.f32.partialorder %v45, 0.0
  %vm1247 = vcmp.eq.f32.partialorder %v46, 0.0
  %vm1248 = vcmp.eq.f32.partialorder %v47, 0.0
  %vm1249 = vcmp.eq.f32.partialorder %v48, 0.0
  %vm1250 = vcmp.eq.f32.partialorder %v49, 0.0
  %vm1251 = vcmp.eq.f32.partialorder %v50, 0.0
  %vm1252 = vcmp.eq.f32.partialorder %v51, 0.0
  %vm1253 = vcmp.eq.f32.partialorder %v52, 0.0
  %vm1254 = vcmp.eq.f32.partialorder %v53, 0.0
  %vm1255 = vcmp.eq.f32.partialorder %v54, 0.0
  %vm1256 = vcmp.eq.f32.partialorder %v55, 0.0
  %vm1257 = vcmp.eq.f32.partialorder %v56, 0.0
  %vm1258 = vcmp.eq.f32.partialorder %v57, 0.0
  %v1259 = vsel %vm1234, 1.0, %v33
  %v1260 = vsel %vm1235, 1.0, %v34
  %v1261 = vsel %vm1236, 1.0, %v35
  %v1262 = vsel %vm1237, 1.0, %v36
  %v1263 = vsel %vm1238, 1.0, %v37
  %v1264 = vsel %vm1239, 1.0, %v38
  %v1265 = vsel %vm1240, 1.0, %v39
  %v1266 = vsel %vm1241, 1.0, %v40
  %v1267 = vsel %vm1242, 1.0, %v41
  %v1268 = vsel %vm1243, 1.0, %v42
  %v1269 = vsel %vm1244, 1.0, %v43
  %v1270 = vsel %vm1245, 1.0, %v44
  %v1271 = vsel %vm1246, 1.0, %v45
  %v1272 = vsel %vm1247, 1.0, %v46
  %v1273 = vsel %vm1248, 1.0, %v47
  %v1274 = vsel %vm1249, 1.0, %v48
  %v1275 = vsel %vm1250, 1.0, %v49
  %v1276 = vsel %vm1251, 1.0, %v50
  %v1277 = vsel %vm1252, 1.0, %v51
  %v1278 = vsel %vm1253, 1.0, %v52
  %v1279 = vsel %vm1254, 1.0, %v53
  %v1280 = vsel %vm1255, 1.0, %v54
  %v1281 = vsel %vm1256, 1.0, %v55
  %v1282 = vsel %vm1257, 1.0, %v56
  %v1283 = vsel %vm1258, 1.0, %v57
  %v1284 = vrcp.pop %v1259
  %v1285 = vrcp.pop %v1260
  %v1286 = vrcp.pop %v1261
  %v1287 = vrcp.pop %v1262
  %v1288 = vrcp.pop %v1263
  %v1289 = vrcp.pop %v1264
  %v1290 = vrcp.pop %v1265
  %v1291 = vrcp.pop %v1266
  %v1292 = vrcp.pop %v1267
  %v1293 = vrcp.pop %v1268
  %v1294 = vrcp.pop %v1269
  %v1295 = vrcp.pop %v1270
  %v1296 = vrcp.pop %v1271
  %v1297 = vrcp.pop %v1272
  %v1298 = vrcp.pop %v1273
  %v1299 = vrcp.pop %v1274
  %v1300 = vrcp.pop %v1275
  %v1301 = vrcp.pop %v1276
  %v1302 = vrcp.pop %v1277
  %v1303 = vrcp.pop %v1278
  %v1304 = vrcp.pop %v1279
  %v1305 = vrcp.pop %v1280
  %v1306 = vrcp.pop %v1281
  %v1307 = vrcp.pop %v1282
  %v1308 = vrcp.pop %v1283
  %1310 = vset.pattern.permute.xlu0 19
  %1311 = vperm.xlu0 %1310, %v1284
  %v1312 = vpop.permute.xlu0 %1311
  %1315 = vset.pattern.permute.xlu0 19
  %1316 = vperm.xlu0 %1315, %v1285
  %v1317 = vpop.permute.xlu0 %1316
  %1320 = vset.pattern.permute.xlu0 19
  %1321 = vperm.xlu0 %1320, %v1286
  %v1322 = vpop.permute.xlu0 %1321
  %1325 = vset.pattern.permute.xlu0 19
  %1326 = vperm.xlu0 %1325, %v1287
  %v1327 = vpop.permute.xlu0 %1326
  %1330 = vset.pattern.permute.xlu0 19
  %1331 = vperm.xlu0 %1330, %v1288
  %v1332 = vpop.permute.xlu0 %1331
  %1335 = vset.pattern.permute.xlu0 19
  %1336 = vperm.xlu0 %1335, %v1289
  %v1337 = vpop.permute.xlu0 %1336
  %1340 = vset.pattern.permute.xlu0 19
  %1341 = vperm.xlu0 %1340, %v1290
  %v1342 = vpop.permute.xlu0 %1341
  %1345 = vset.pattern.permute.xlu0 19
  %1346 = vperm.xlu0 %1345, %v1291
  %v1347 = vpop.permute.xlu0 %1346
  %1350 = vset.pattern.permute.xlu0 19
  %1351 = vperm.xlu0 %1350, %v1292
  %v1352 = vpop.permute.xlu0 %1351
  %1355 = vset.pattern.permute.xlu0 19
  %1356 = vperm.xlu0 %1355, %v1293
  %v1357 = vpop.permute.xlu0 %1356
  %1360 = vset.pattern.permute.xlu0 19
  %1361 = vperm.xlu0 %1360, %v1294
  %v1362 = vpop.permute.xlu0 %1361
  %1365 = vset.pattern.permute.xlu0 19
  %1366 = vperm.xlu0 %1365, %v1295
  %v1367 = vpop.permute.xlu0 %1366
  %1370 = vset.pattern.permute.xlu0 19
  %1371 = vperm.xlu0 %1370, %v1296
  %v1372 = vpop.permute.xlu0 %1371
  %1375 = vset.pattern.permute.xlu0 19
  %1376 = vperm.xlu0 %1375, %v1297
  %v1377 = vpop.permute.xlu0 %1376
  %1380 = vset.pattern.permute.xlu0 19
  %1381 = vperm.xlu0 %1380, %v1298
  %v1382 = vpop.permute.xlu0 %1381
  %1385 = vset.pattern.permute.xlu0 19
  %1386 = vperm.xlu0 %1385, %v1299
  %v1387 = vpop.permute.xlu0 %1386
  %1390 = vset.pattern.permute.xlu0 19
  %1391 = vperm.xlu0 %1390, %v1300
  %v1392 = vpop.permute.xlu0 %1391
  %1395 = vset.pattern.permute.xlu0 19
  %1396 = vperm.xlu0 %1395, %v1301
  %v1397 = vpop.permute.xlu0 %1396
  %1400 = vset.pattern.permute.xlu0 19
  %1401 = vperm.xlu0 %1400, %v1302
  %v1402 = vpop.permute.xlu0 %1401
  %1405 = vset.pattern.permute.xlu0 19
  %1406 = vperm.xlu0 %1405, %v1303
  %v1407 = vpop.permute.xlu0 %1406
  %1410 = vset.pattern.permute.xlu0 19
  %1411 = vperm.xlu0 %1410, %v1304
  %v1412 = vpop.permute.xlu0 %1411
  %1415 = vset.pattern.permute.xlu0 19
  %1416 = vperm.xlu0 %1415, %v1305
  %v1417 = vpop.permute.xlu0 %1416
  %1420 = vset.pattern.permute.xlu0 19
  %1421 = vperm.xlu0 %1420, %v1306
  %v1422 = vpop.permute.xlu0 %1421
  %1425 = vset.pattern.permute.xlu0 19
  %1426 = vperm.xlu0 %1425, %v1307
  %v1427 = vpop.permute.xlu0 %1426
  %1430 = vset.pattern.permute.xlu0 19
  %1431 = vperm.xlu0 %1430, %v1308
  %v1432 = vpop.permute.xlu0 %1431
  %v1434 = vmul.f32 %v634, %v1312
  %v1435 = vmul.f32 %v637, %v1317
  %v1436 = vmul.f32 %v642, %v1322
  %v1437 = vmul.f32 %v645, %v1327
  %v1438 = vmul.f32 %v650, %v1332
  %v1439 = vmul.f32 %v653, %v1337
  %v1440 = vmul.f32 %v658, %v1342
  %v1441 = vmul.f32 %v661, %v1347
  %v1442 = vmul.f32 %v666, %v1352
  %v1443 = vmul.f32 %v669, %v1357
  %v1444 = vmul.f32 %v674, %v1362
  %v1445 = vmul.f32 %v677, %v1367
  %v1446 = vmul.f32 %v682, %v1372
  %v1447 = vmul.f32 %v685, %v1377
  %v1448 = vmul.f32 %v690, %v1382
  %v1449 = vmul.f32 %v693, %v1387
  %v1450 = vmul.f32 %v698, %v1392
  %v1451 = vmul.f32 %v701, %v1397
  %v1452 = vmul.f32 %v706, %v1402
  %v1453 = vmul.f32 %v709, %v1407
  %v1454 = vmul.f32 %v714, %v1412
  %v1455 = vmul.f32 %v717, %v1417
  %v1456 = vmul.f32 %v722, %v1422
  %v1457 = vmul.f32 %v725, %v1427
  %v1458 = vmul.f32 %v730, %v1432
  %v1459 = vadd.f32 %v1434, %v1133
  %v1460 = vadd.f32 %v1435, %v1136
  %v1461 = vadd.f32 %v1436, %v1141
  %v1462 = vadd.f32 %v1437, %v1144
  %v1463 = vadd.f32 %v1438, %v1149
  %v1464 = vadd.f32 %v1439, %v1152
  %v1465 = vadd.f32 %v1440, %v1157
  %v1466 = vadd.f32 %v1441, %v1160
  %v1467 = vadd.f32 %v1442, %v1165
  %v1468 = vadd.f32 %v1443, %v1168
  %v1469 = vadd.f32 %v1444, %v1173
  %v1470 = vadd.f32 %v1445, %v1176
  %v1471 = vadd.f32 %v1446, %v1181
  %v1472 = vadd.f32 %v1447, %v1184
  %v1473 = vadd.f32 %v1448, %v1189
  %v1474 = vadd.f32 %v1449, %v1192
  %v1475 = vadd.f32 %v1450, %v1197
  %v1476 = vadd.f32 %v1451, %v1200
  %v1477 = vadd.f32 %v1452, %v1205
  %v1478 = vadd.f32 %v1453, %v1208
  %v1479 = vadd.f32 %v1454, %v1213
  %v1480 = vadd.f32 %v1455, %v1216
  %v1481 = vadd.f32 %v1456, %v1221
  %v1482 = vadd.f32 %v1457, %v1224
  %v1483 = vadd.f32 %v1458, %v1229
  %v1484 = vld [vmem:[%s8] sm:$0x1]
  %v1486 = vlaneseq
  %v1487 = vshrl.u32 %v1486, 7
  %v1488 = vsub.s32 0, %v1487
  %v1489 = vrot.slane %v1484, %v1488
  %v1491 = vadd.f32 %v1459, %v1489
  %v1492 = vadd.f32 %v1460, %v1489
  %v1493 = vadd.f32 %v1461, %v1489
  %v1494 = vadd.f32 %v1462, %v1489
  %v1495 = vadd.f32 %v1463, %v1489
  %v1496 = vadd.f32 %v1464, %v1489
  %v1497 = vadd.f32 %v1465, %v1489
  %v1498 = vadd.f32 %v1466, %v1489
  %v1499 = vadd.f32 %v1467, %v1489
  %v1500 = vadd.f32 %v1468, %v1489
  %v1501 = vadd.f32 %v1469, %v1489
  %v1502 = vadd.f32 %v1470, %v1489
  %v1503 = vadd.f32 %v1471, %v1489
  %v1504 = vadd.f32 %v1472, %v1489
  %v1505 = vadd.f32 %v1473, %v1489
  %v1506 = vadd.f32 %v1474, %v1489
  %v1507 = vadd.f32 %v1475, %v1489
  %v1508 = vadd.f32 %v1476, %v1489
  %v1509 = vadd.f32 %v1477, %v1489
  %v1510 = vadd.f32 %v1478, %v1489
  %v1511 = vadd.f32 %v1479, %v1489
  %v1512 = vadd.f32 %v1480, %v1489
  %v1513 = vadd.f32 %v1481, %v1489
  %v1514 = vadd.f32 %v1482, %v1489
  %v1515 = vadd.f32 %v1483, %v1489
  %vm1516 = vcmask 588800
  %1517 = vst.msk [vmem:[%s9] sm:$0xff] %vm1516, %v1491
  %1518 = vst.msk [vmem:[%s9 + $0x8] sm:$0xff] %vm1516, %v1492
  %1519 = vst.msk [vmem:[%s9 + $0x10] sm:$0xff] %vm1516, %v1493
  %1520 = vst.msk [vmem:[%s9 + $0x18] sm:$0xff] %vm1516, %v1494
  %1521 = vst.msk [vmem:[%s9 + $0x20] sm:$0xff] %vm1516, %v1495
  %1522 = vst.msk [vmem:[%s9 + $0x28] sm:$0xff] %vm1516, %v1496
  %1523 = vst.msk [vmem:[%s9 + $0x30] sm:$0xff] %vm1516, %v1497
  %1524 = vst.msk [vmem:[%s9 + $0x38] sm:$0xff] %vm1516, %v1498
  %1525 = vst.msk [vmem:[%s9 + $0x40] sm:$0xff] %vm1516, %v1499
  %1526 = vst.msk [vmem:[%s9 + $0x48] sm:$0xff] %vm1516, %v1500
  %1527 = vst.msk [vmem:[%s9 + $0x50] sm:$0xff] %vm1516, %v1501
  %1528 = vst.msk [vmem:[%s9 + $0x58] sm:$0xff] %vm1516, %v1502
  %1529 = vst.msk [vmem:[%s9 + $0x60] sm:$0xff] %vm1516, %v1503
  %1530 = vst.msk [vmem:[%s9 + $0x68] sm:$0xff] %vm1516, %v1504
  %1531 = vst.msk [vmem:[%s9 + $0x70] sm:$0xff] %vm1516, %v1505
  %1532 = vst.msk [vmem:[%s9 + $0x78] sm:$0xff] %vm1516, %v1506
  %1533 = vst.msk [vmem:[%s9 + $0x80] sm:$0xff] %vm1516, %v1507
  %1534 = vst.msk [vmem:[%s9 + $0x88] sm:$0xff] %vm1516, %v1508
  %1535 = vst.msk [vmem:[%s9 + $0x90] sm:$0xff] %vm1516, %v1509
  %1536 = vst.msk [vmem:[%s9 + $0x98] sm:$0xff] %vm1516, %v1510
  %1537 = vst.msk [vmem:[%s9 + $0xa0] sm:$0xff] %vm1516, %v1511
  %1538 = vst.msk [vmem:[%s9 + $0xa8] sm:$0xff] %vm1516, %v1512
  %1539 = vst.msk [vmem:[%s9 + $0xb0] sm:$0xff] %vm1516, %v1513
  %1540 = vst.msk [vmem:[%s9 + $0xb8] sm:$0xff] %vm1516, %v1514
  %1541 = vst.msk [vmem:[%s9 + $0xc0] sm:$0xff] %vm1516, %v1515
  // Predicated region
  $region38: #{mlp_decoder_hetero.1} parent=0 // pred_check
    _
  $region39: #{mlp_decoder_hetero.1} parent=0 // pred_check_branch
    %1543 = sbr.rel (0) target = $region41
  $region40: #{mlp_decoder_hetero.1} parent=0 // pred_region
    _
  $region41: #{mlp_decoder_hetero.1} parent=0 // pred_fallthru
    _
  // Predicated region
  $region42: #{mlp_decoder_hetero.1} parent=0 // pred_check
    _
  $region43: #{mlp_decoder_hetero.1} parent=0 // pred_check_branch
    %1545 = sbr.rel (0) target = $region45
  $region44: #{mlp_decoder_hetero.1} parent=0 // pred_region
    _
  $region45: #{mlp_decoder_hetero.1} parent=0 // pred_fallthru
    _

</llo_original>
